<compile_context>
chip_gen: v7x
topology: tpu7x:2x2x1
jax: 0.10.0
libtpu: 0.0.40
codegen_flags: <defaults>
</compile_context>

<pallas_src>
import functools

import jax
import jax.numpy as jnp
from jax.experimental import pallas as pl
from jax.experimental.pallas import tpu as pltpu

_SUBLANE = 8


def _pick_matmul_dtype():
    """bf16 MXU operands on v6e/v7x (native fast path), f32 elsewhere (v5e/v4/CPU)."""
    try:
        dev = jax.devices()[0]
        kind = dev.device_kind.lower()
        if dev.platform != "tpu":
            return jnp.float32
    except Exception:
        return jnp.float32
    if "v6" in kind or "v7" in kind:
        return jnp.bfloat16
    return jnp.float32


# ------------------------------------------------------------------
# LSTM cell update (all elementwise math in f32 on every generation)
# ------------------------------------------------------------------
def _lstm_cell(gates, c_prev, H):
    """gates: (Bp, 4H) f32 pre-activations, PyTorch i,f,g,o column order."""
    sig = jax.nn.sigmoid(gates)
    th = jnp.tanh(gates)
    i = sig[:, 0 * H:1 * H]
    f = sig[:, 1 * H:2 * H]
    g = th[:, 2 * H:3 * H]
    o = sig[:, 3 * H:4 * H]
    c = f * c_prev + i * g
    h = o * jnp.tanh(c)
    return h, c


# ------------------------------------------------------------------
# Fused kernel: all LSTM layers + head, single invocation (no grid)
# ------------------------------------------------------------------
def _fused_lstm_head_kernel(num_layers, T, Bp, H, mm_dtype, *refs):
    # refs layout: x2, wi0, wh0, b0, (wstack, b) per upper layer,
    #              w1, b1, w23, b23, out
    x2_ref = refs[0]
    wi0_ref, wh0_ref, b0_ref = refs[1], refs[2], refs[3]
    idx = 4
    upper_refs = []
    for _ in range(num_layers - 1):
        upper_refs.append((refs[idx], refs[idx + 1]))
        idx += 2
    w1_ref, b1_ref, w23_ref, b23_ref = refs[idx:idx + 4]
    out_ref = refs[idx + 4]

    f32 = jnp.float32

    # ---- Layer-0 input projection hoisted out of the recurrence:
    #      one (T*Bp, D) @ (D, 4H) matmul covers every timestep (bias folded in).
    gates_x = (jnp.dot(x2_ref[...], wi0_ref[...], preferred_element_type=f32)
               + b0_ref[...])                                    # (T*Bp, 4H), time-major

    wh0 = wh0_ref[...]

    # Load stacked upper-layer weights once; pre-broadcast biases once
    # (hoisted: JAX does not CSE broadcast_in_dim inside the unrolled loop).
    upper = []
    for (w_ref, b_ref) in upper_refs:
        upper.append((w_ref[...], jnp.broadcast_to(b_ref[...], (Bp, 4 * H))))

    hs = [None] * num_layers
    cs = [jnp.zeros((Bp, H), f32) for _ in range(num_layers)]

    # ---- t = 0 peeled: all h/c are zero, skip every recurrent (h @ W_hh) dot ----
    hs[0], cs[0] = _lstm_cell(gates_x[0:Bp, :], cs[0], H)
    for l in range(1, num_layers):
        wstack, b_b = upper[l - 1]
        # own-state h_l is zero at t=0 -> only the W_ih half of the stacked weight.
        gl = jnp.dot(hs[l - 1].astype(mm_dtype), wstack[:H, :],
                     preferred_element_type=f32) + b_b
        hs[l], cs[l] = _lstm_cell(gl, cs[l], H)

    # ---- t = 1..T-1, fully unrolled (T is small & static); each gates_x slice
    #      is a sublane-aligned whole (8, 4H) tile thanks to batch padding. ----
    for t in range(1, T):
        g0 = gates_x[t * Bp:(t + 1) * Bp, :] + jnp.dot(
            hs[0].astype(mm_dtype), wh0, preferred_element_type=f32)
        hs[0], cs[0] = _lstm_cell(g0, cs[0], H)
        for l in range(1, num_layers):
            wstack, b_b = upper[l - 1]
            # One stacked dot (K=2H) instead of two K=H dots per upper layer/step.
            hcat = jnp.concatenate([hs[l - 1], hs[l]], axis=1).astype(mm_dtype)
            gl = jnp.dot(hcat, wstack, preferred_element_type=f32) + b_b
            hs[l], cs[l] = _lstm_cell(gl, cs[l], H)

    # ---- Head: relu(output[:, -1, :]) -> fc1 -> relu -> fused(fc2@fc3) -> softmax ----
    h_last = jnp.maximum(hs[-1], 0.0)
    z1 = jnp.dot(h_last.astype(mm_dtype), w1_ref[...],
                 preferred_element_type=f32) + b1_ref[...]
    z1 = jnp.maximum(z1, 0.0)
    logits = jnp.dot(z1.astype(mm_dtype), w23_ref[...],
                     preferred_element_type=f32) + b23_ref[...]
    m = jnp.max(logits, axis=1, keepdims=True)
    e = jnp.exp(logits - m)
    out_ref[...] = e / jnp.sum(e, axis=1, keepdims=True)


# ------------------------------------------------------------------
# Parameters (PyTorch-equivalent layout, pre-transposed for x @ W use)
# ------------------------------------------------------------------
def init_params(key, num_classes, input_size, hidden_size, num_layers):
    H = hidden_size
    k = 1.0 / jnp.sqrt(H)

    def lstm_layer(key, d_in):
        k1, k2, k3, k4 = jax.random.split(key, 4)
        wi = jax.random.uniform(k1, (d_in, 4 * H), jnp.float32, -k, k)   # W_ih^T
        wh = jax.random.uniform(k2, (H, 4 * H), jnp.float32, -k, k)      # W_hh^T
        b_ih = jax.random.uniform(k3, (4 * H,), jnp.float32, -k, k)
        b_hh = jax.random.uniform(k4, (4 * H,), jnp.float32, -k, k)
        return wi, wh, (b_ih + b_hh).reshape(1, 4 * H)

    key, k0 = jax.random.split(key)
    wi0, wh0, b0 = lstm_layer(k0, input_size)
    params = {"lstm0": (wi0, wh0, b0), "lstm_upper": []}
    for _ in range(1, num_layers):
        key, kl = jax.random.split(key)
        wi, wh, b = lstm_layer(kl, H)
        # Stack [W_ih^T; W_hh^T] -> (2H, 4H): one recurrent dot per step/layer.
        params["lstm_upper"].append((jnp.concatenate([wi, wh], axis=0), b))

    def linear(key, fan_in, fan_out):
        kk = 1.0 / jnp.sqrt(fan_in)
        k1, k2 = jax.random.split(key)
        w = jax.random.uniform(k1, (fan_in, fan_out), jnp.float32, -kk, kk)
        b = jax.random.uniform(k2, (1, fan_out), jnp.float32, -kk, kk)
        return w, b

    key, ka, kb, kc = jax.random.split(key, 4)
    w1, b1 = linear(ka, H, 128)
    w2, b2 = linear(kb, 128, 32)
    w3, b3 = linear(kc, 32, num_classes)
    params["fc1"] = (w1, b1)
    # fc2 -> fc3 has no nonlinearity in between: fold into one linear at init.
    params["fc23"] = (w2 @ w3, b2 @ w3 + b3)
    return params


# ------------------------------------------------------------------
# Full model wrapper (single fused pallas_call)
# ------------------------------------------------------------------
def lstm_forward(params, x_btd):
    """x_btd: (B, T, D) batch_first, like the PyTorch module (eval mode)."""
    B, T, D = x_btd.shape
    num_layers = 1 + len(params["lstm_upper"])
    H = params["lstm0"][1].shape[0]
    C = params["fc23"][0].shape[1]

    mm_dtype = _pick_matmul_dtype()

    # Pad batch to a sublane multiple so every per-timestep tile is vreg-aligned.
    # Padded rows are all-zero input; they run through the LSTM independently
    # and are sliced off below, so they never affect the real rows.
    Bp = ((B + _SUBLANE - 1) // _SUBLANE) * _SUBLANE
    x_p = jnp.pad(x_btd, ((0, Bp - B), (0, 0), (0, 0)))
    # Time-major flatten: gates_x[t*Bp:(t+1)*Bp, :] is a contiguous sublane block.
    x2 = jnp.transpose(x_p, (1, 0, 2)).reshape(T * Bp, D).astype(mm_dtype)

    wi0, wh0, b0 = params["lstm0"]
    args = [x2, wi0.astype(mm_dtype), wh0.astype(mm_dtype), b0]
    for (wstack, b) in params["lstm_upper"]:
        args += [wstack.astype(mm_dtype), b]
    w1, b1 = params["fc1"]
    w23, b23 = params["fc23"]
    args += [w1.astype(mm_dtype), b1, w23.astype(mm_dtype), b23]

    kernel = functools.partial(_fused_lstm_head_kernel, num_layers, T, Bp, H,
                               mm_dtype)
    vmem = pltpu.MemorySpace.VMEM
    out_p = pl.pallas_call(
        kernel,
        out_shape=jax.ShapeDtypeStruct((Bp, C), jnp.float32),
        in_specs=[pl.BlockSpec(memory_space=vmem)] * len(args),
        out_specs=pl.BlockSpec(memory_space=vmem),
    )(*args)
    return out_p[:B]


if __name__ == "__main__":
    num_classes, input_size, hidden_size, num_layers = 4, 16, 32, 2
    B, T = 2, 8

    key = jax.random.PRNGKey(0)
    key, kx, kp = jax.random.split(key, 3)
    x = jax.random.normal(kx, (B, T, input_size), jnp.float32)
    params = init_params(kp, num_classes, input_size, hidden_size, num_layers)

    out = jax.block_until_ready(jax.jit(lstm_forward)(params, x))
    assert out.shape == (B, num_classes)
    assert jnp.allclose(jnp.sum(out, axis=1), 1.0, atol=1e-4)
    print("KERNEL_OK")
</pallas_src>

<mosaic_0001>
module attributes {stable_mosaic.version = 11 : i64} {
  func.func @_fused_lstm_head_kernel(%arg0: memref<64x16xf32, #tpu.memory_space<vmem>>, %arg1: memref<16x128xf32, #tpu.memory_space<vmem>>, %arg2: memref<32x128xf32, #tpu.memory_space<vmem>>, %arg3: memref<1x128xf32, #tpu.memory_space<vmem>>, %arg4: memref<64x128xf32, #tpu.memory_space<vmem>>, %arg5: memref<1x128xf32, #tpu.memory_space<vmem>>, %arg6: memref<32x128xf32, #tpu.memory_space<vmem>>, %arg7: memref<1x128xf32, #tpu.memory_space<vmem>>, %arg8: memref<128x4xf32, #tpu.memory_space<vmem>>, %arg9: memref<1x4xf32, #tpu.memory_space<vmem>>, %arg10: memref<8x4xf32, #tpu.memory_space<vmem>>) attributes {dimension_semantics = [], scalar_prefetch = 0 : i64, scratch_operands = 0 : i64, tpu.core_type = #tpu.core_type<tc>} {
    %c0 = arith.constant 0 : index
    %c0_0 = arith.constant 0 : index
    %0 = vector.load %arg0[%c0, %c0_0] : memref<64x16xf32, #tpu.memory_space<vmem>>, vector<64x16xf32>
    %c0_1 = arith.constant 0 : index
    %c0_2 = arith.constant 0 : index
    %1 = vector.load %arg1[%c0_1, %c0_2] : memref<16x128xf32, #tpu.memory_space<vmem>>, vector<16x128xf32>
    %cst = arith.constant dense<0.000000e+00> : vector<64x128xf32>
    %2 = tpu.matmul %0, %1, %cst {dimension_numbers = #tpu.dot_dimension_numbers<[1], [0], [0], [1], [0, 0, 1, 1], [], []>} : vector<64x16xf32>, vector<16x128xf32>, vector<64x128xf32> -> vector<64x128xf32>
    %c0_3 = arith.constant 0 : index
    %c0_4 = arith.constant 0 : index
    %3 = vector.load %arg3[%c0_3, %c0_4] : memref<1x128xf32, #tpu.memory_space<vmem>>, vector<1x128xf32>
    %4 = vector.broadcast %3 : vector<1x128xf32> to vector<64x128xf32>
    %5 = arith.addf %2, %4 : vector<64x128xf32>
    %c0_5 = arith.constant 0 : index
    %c0_6 = arith.constant 0 : index
    %6 = vector.load %arg2[%c0_5, %c0_6] : memref<32x128xf32, #tpu.memory_space<vmem>>, vector<32x128xf32>
    %c0_7 = arith.constant 0 : index
    %c0_8 = arith.constant 0 : index
    %7 = vector.load %arg4[%c0_7, %c0_8] : memref<64x128xf32, #tpu.memory_space<vmem>>, vector<64x128xf32>
    %c0_9 = arith.constant 0 : index
    %c0_10 = arith.constant 0 : index
    %8 = vector.load %arg5[%c0_9, %c0_10] : memref<1x128xf32, #tpu.memory_space<vmem>>, vector<1x128xf32>
    %9 = vector.shape_cast %8 : vector<1x128xf32> to vector<1x128xf32>
    %10 = vector.broadcast %9 : vector<1x128xf32> to vector<8x128xf32>
    %cst_11 = arith.constant 0.000000e+00 : f32
    %11 = vector.broadcast %cst_11 : f32 to vector<8x32xf32>
    %cst_12 = arith.constant 0.000000e+00 : f32
    %12 = vector.broadcast %cst_12 : f32 to vector<8x32xf32>
    %13 = vector.extract_strided_slice %5 {offsets = [0, 0], sizes = [8, 128], strides = [1, 1]} : vector<64x128xf32> to vector<8x128xf32>
    %14 = arith.negf %13 : vector<8x128xf32>
    %15 = math.exp %14 : vector<8x128xf32>
    %cst_13 = arith.constant 1.000000e+00 : f32
    %16 = vector.broadcast %cst_13 : f32 to vector<8x128xf32>
    %17 = arith.addf %16, %15 : vector<8x128xf32>
    %18 = arith.divf %16, %17 : vector<8x128xf32>
    %19 = math.tanh %13 : vector<8x128xf32>
    %20 = vector.extract_strided_slice %18 {offsets = [0, 0], sizes = [8, 32], strides = [1, 1]} : vector<8x128xf32> to vector<8x32xf32>
    %21 = vector.extract_strided_slice %18 {offsets = [0, 32], sizes = [8, 32], strides = [1, 1]} : vector<8x128xf32> to vector<8x32xf32>
    %22 = vector.extract_strided_slice %19 {offsets = [0, 64], sizes = [8, 32], strides = [1, 1]} : vector<8x128xf32> to vector<8x32xf32>
    %23 = vector.extract_strided_slice %18 {offsets = [0, 96], sizes = [8, 32], strides = [1, 1]} : vector<8x128xf32> to vector<8x32xf32>
    %24 = arith.mulf %21, %11 : vector<8x32xf32>
    %25 = arith.mulf %20, %22 : vector<8x32xf32>
    %26 = arith.addf %24, %25 : vector<8x32xf32>
    %27 = math.tanh %26 : vector<8x32xf32>
    %28 = arith.mulf %23, %27 : vector<8x32xf32>
    %29 = vector.extract_strided_slice %7 {offsets = [0, 0], sizes = [32, 128], strides = [1, 1]} : vector<64x128xf32> to vector<32x128xf32>
    %cst_14 = arith.constant dense<0.000000e+00> : vector<8x128xf32>
    %30 = tpu.matmul %28, %29, %cst_14 {dimension_numbers = #tpu.dot_dimension_numbers<[1], [0], [0], [1], [0, 0, 1, 1], [], []>} : vector<8x32xf32>, vector<32x128xf32>, vector<8x128xf32> -> vector<8x128xf32>
    %31 = arith.addf %30, %10 : vector<8x128xf32>
    %32 = arith.negf %31 : vector<8x128xf32>
    %33 = math.exp %32 : vector<8x128xf32>
    %cst_15 = arith.constant 1.000000e+00 : f32
    %34 = vector.broadcast %cst_15 : f32 to vector<8x128xf32>
    %35 = arith.addf %34, %33 : vector<8x128xf32>
    %36 = arith.divf %34, %35 : vector<8x128xf32>
    %37 = math.tanh %31 : vector<8x128xf32>
    %38 = vector.extract_strided_slice %36 {offsets = [0, 0], sizes = [8, 32], strides = [1, 1]} : vector<8x128xf32> to vector<8x32xf32>
    %39 = vector.extract_strided_slice %36 {offsets = [0, 32], sizes = [8, 32], strides = [1, 1]} : vector<8x128xf32> to vector<8x32xf32>
    %40 = vector.extract_strided_slice %37 {offsets = [0, 64], sizes = [8, 32], strides = [1, 1]} : vector<8x128xf32> to vector<8x32xf32>
    %41 = vector.extract_strided_slice %36 {offsets = [0, 96], sizes = [8, 32], strides = [1, 1]} : vector<8x128xf32> to vector<8x32xf32>
    %42 = arith.mulf %39, %12 : vector<8x32xf32>
    %43 = arith.mulf %38, %40 : vector<8x32xf32>
    %44 = arith.addf %42, %43 : vector<8x32xf32>
    %45 = math.tanh %44 : vector<8x32xf32>
    %46 = arith.mulf %41, %45 : vector<8x32xf32>
    %47 = vector.extract_strided_slice %5 {offsets = [8, 0], sizes = [8, 128], strides = [1, 1]} : vector<64x128xf32> to vector<8x128xf32>
    %cst_16 = arith.constant dense<0.000000e+00> : vector<8x128xf32>
    %48 = tpu.matmul %28, %6, %cst_16 {dimension_numbers = #tpu.dot_dimension_numbers<[1], [0], [0], [1], [0, 0, 1, 1], [], []>} : vector<8x32xf32>, vector<32x128xf32>, vector<8x128xf32> -> vector<8x128xf32>
    %49 = arith.addf %47, %48 : vector<8x128xf32>
    %50 = arith.negf %49 : vector<8x128xf32>
    %51 = math.exp %50 : vector<8x128xf32>
    %cst_17 = arith.constant 1.000000e+00 : f32
    %52 = vector.broadcast %cst_17 : f32 to vector<8x128xf32>
    %53 = arith.addf %52, %51 : vector<8x128xf32>
    %54 = arith.divf %52, %53 : vector<8x128xf32>
    %55 = math.tanh %49 : vector<8x128xf32>
    %56 = vector.extract_strided_slice %54 {offsets = [0, 0], sizes = [8, 32], strides = [1, 1]} : vector<8x128xf32> to vector<8x32xf32>
    %57 = vector.extract_strided_slice %54 {offsets = [0, 32], sizes = [8, 32], strides = [1, 1]} : vector<8x128xf32> to vector<8x32xf32>
    %58 = vector.extract_strided_slice %55 {offsets = [0, 64], sizes = [8, 32], strides = [1, 1]} : vector<8x128xf32> to vector<8x32xf32>
    %59 = vector.extract_strided_slice %54 {offsets = [0, 96], sizes = [8, 32], strides = [1, 1]} : vector<8x128xf32> to vector<8x32xf32>
    %60 = arith.mulf %57, %26 : vector<8x32xf32>
    %61 = arith.mulf %56, %58 : vector<8x32xf32>
    %62 = arith.addf %60, %61 : vector<8x32xf32>
    %63 = math.tanh %62 : vector<8x32xf32>
    %64 = arith.mulf %59, %63 : vector<8x32xf32>
    %65 = tpu.concatenate %64, %46 in 1 : vector<8x32xf32>, vector<8x32xf32> -> vector<8x64xf32>
    %cst_18 = arith.constant dense<0.000000e+00> : vector<8x128xf32>
    %66 = tpu.matmul %65, %7, %cst_18 {dimension_numbers = #tpu.dot_dimension_numbers<[1], [0], [0], [1], [0, 0, 1, 1], [], []>} : vector<8x64xf32>, vector<64x128xf32>, vector<8x128xf32> -> vector<8x128xf32>
    %67 = arith.addf %66, %10 : vector<8x128xf32>
    %68 = arith.negf %67 : vector<8x128xf32>
    %69 = math.exp %68 : vector<8x128xf32>
    %cst_19 = arith.constant 1.000000e+00 : f32
    %70 = vector.broadcast %cst_19 : f32 to vector<8x128xf32>
    %71 = arith.addf %70, %69 : vector<8x128xf32>
    %72 = arith.divf %70, %71 : vector<8x128xf32>
    %73 = math.tanh %67 : vector<8x128xf32>
    %74 = vector.extract_strided_slice %72 {offsets = [0, 0], sizes = [8, 32], strides = [1, 1]} : vector<8x128xf32> to vector<8x32xf32>
    %75 = vector.extract_strided_slice %72 {offsets = [0, 32], sizes = [8, 32], strides = [1, 1]} : vector<8x128xf32> to vector<8x32xf32>
    %76 = vector.extract_strided_slice %73 {offsets = [0, 64], sizes = [8, 32], strides = [1, 1]} : vector<8x128xf32> to vector<8x32xf32>
    %77 = vector.extract_strided_slice %72 {offsets = [0, 96], sizes = [8, 32], strides = [1, 1]} : vector<8x128xf32> to vector<8x32xf32>
    %78 = arith.mulf %75, %44 : vector<8x32xf32>
    %79 = arith.mulf %74, %76 : vector<8x32xf32>
    %80 = arith.addf %78, %79 : vector<8x32xf32>
    %81 = math.tanh %80 : vector<8x32xf32>
    %82 = arith.mulf %77, %81 : vector<8x32xf32>
    %83 = vector.extract_strided_slice %5 {offsets = [16, 0], sizes = [8, 128], strides = [1, 1]} : vector<64x128xf32> to vector<8x128xf32>
    %cst_20 = arith.constant dense<0.000000e+00> : vector<8x128xf32>
    %84 = tpu.matmul %64, %6, %cst_20 {dimension_numbers = #tpu.dot_dimension_numbers<[1], [0], [0], [1], [0, 0, 1, 1], [], []>} : vector<8x32xf32>, vector<32x128xf32>, vector<8x128xf32> -> vector<8x128xf32>
    %85 = arith.addf %83, %84 : vector<8x128xf32>
    %86 = arith.negf %85 : vector<8x128xf32>
    %87 = math.exp %86 : vector<8x128xf32>
    %cst_21 = arith.constant 1.000000e+00 : f32
    %88 = vector.broadcast %cst_21 : f32 to vector<8x128xf32>
    %89 = arith.addf %88, %87 : vector<8x128xf32>
    %90 = arith.divf %88, %89 : vector<8x128xf32>
    %91 = math.tanh %85 : vector<8x128xf32>
    %92 = vector.extract_strided_slice %90 {offsets = [0, 0], sizes = [8, 32], strides = [1, 1]} : vector<8x128xf32> to vector<8x32xf32>
    %93 = vector.extract_strided_slice %90 {offsets = [0, 32], sizes = [8, 32], strides = [1, 1]} : vector<8x128xf32> to vector<8x32xf32>
    %94 = vector.extract_strided_slice %91 {offsets = [0, 64], sizes = [8, 32], strides = [1, 1]} : vector<8x128xf32> to vector<8x32xf32>
    %95 = vector.extract_strided_slice %90 {offsets = [0, 96], sizes = [8, 32], strides = [1, 1]} : vector<8x128xf32> to vector<8x32xf32>
    %96 = arith.mulf %93, %62 : vector<8x32xf32>
    %97 = arith.mulf %92, %94 : vector<8x32xf32>
    %98 = arith.addf %96, %97 : vector<8x32xf32>
    %99 = math.tanh %98 : vector<8x32xf32>
    %100 = arith.mulf %95, %99 : vector<8x32xf32>
    %101 = tpu.concatenate %100, %82 in 1 : vector<8x32xf32>, vector<8x32xf32> -> vector<8x64xf32>
    %cst_22 = arith.constant dense<0.000000e+00> : vector<8x128xf32>
    %102 = tpu.matmul %101, %7, %cst_22 {dimension_numbers = #tpu.dot_dimension_numbers<[1], [0], [0], [1], [0, 0, 1, 1], [], []>} : vector<8x64xf32>, vector<64x128xf32>, vector<8x128xf32> -> vector<8x128xf32>
    %103 = arith.addf %102, %10 : vector<8x128xf32>
    %104 = arith.negf %103 : vector<8x128xf32>
    %105 = math.exp %104 : vector<8x128xf32>
    %cst_23 = arith.constant 1.000000e+00 : f32
    %106 = vector.broadcast %cst_23 : f32 to vector<8x128xf32>
    %107 = arith.addf %106, %105 : vector<8x128xf32>
    %108 = arith.divf %106, %107 : vector<8x128xf32>
    %109 = math.tanh %103 : vector<8x128xf32>
    %110 = vector.extract_strided_slice %108 {offsets = [0, 0], sizes = [8, 32], strides = [1, 1]} : vector<8x128xf32> to vector<8x32xf32>
    %111 = vector.extract_strided_slice %108 {offsets = [0, 32], sizes = [8, 32], strides = [1, 1]} : vector<8x128xf32> to vector<8x32xf32>
    %112 = vector.extract_strided_slice %109 {offsets = [0, 64], sizes = [8, 32], strides = [1, 1]} : vector<8x128xf32> to vector<8x32xf32>
    %113 = vector.extract_strided_slice %108 {offsets = [0, 96], sizes = [8, 32], strides = [1, 1]} : vector<8x128xf32> to vector<8x32xf32>
    %114 = arith.mulf %111, %80 : vector<8x32xf32>
    %115 = arith.mulf %110, %112 : vector<8x32xf32>
    %116 = arith.addf %114, %115 : vector<8x32xf32>
    %117 = math.tanh %116 : vector<8x32xf32>
    %118 = arith.mulf %113, %117 : vector<8x32xf32>
    %119 = vector.extract_strided_slice %5 {offsets = [24, 0], sizes = [8, 128], strides = [1, 1]} : vector<64x128xf32> to vector<8x128xf32>
    %cst_24 = arith.constant dense<0.000000e+00> : vector<8x128xf32>
    %120 = tpu.matmul %100, %6, %cst_24 {dimension_numbers = #tpu.dot_dimension_numbers<[1], [0], [0], [1], [0, 0, 1, 1], [], []>} : vector<8x32xf32>, vector<32x128xf32>, vector<8x128xf32> -> vector<8x128xf32>
    %121 = arith.addf %119, %120 : vector<8x128xf32>
    %122 = arith.negf %121 : vector<8x128xf32>
    %123 = math.exp %122 : vector<8x128xf32>
    %cst_25 = arith.constant 1.000000e+00 : f32
    %124 = vector.broadcast %cst_25 : f32 to vector<8x128xf32>
    %125 = arith.addf %124, %123 : vector<8x128xf32>
    %126 = arith.divf %124, %125 : vector<8x128xf32>
    %127 = math.tanh %121 : vector<8x128xf32>
    %128 = vector.extract_strided_slice %126 {offsets = [0, 0], sizes = [8, 32], strides = [1, 1]} : vector<8x128xf32> to vector<8x32xf32>
    %129 = vector.extract_strided_slice %126 {offsets = [0, 32], sizes = [8, 32], strides = [1, 1]} : vector<8x128xf32> to vector<8x32xf32>
    %130 = vector.extract_strided_slice %127 {offsets = [0, 64], sizes = [8, 32], strides = [1, 1]} : vector<8x128xf32> to vector<8x32xf32>
    %131 = vector.extract_strided_slice %126 {offsets = [0, 96], sizes = [8, 32], strides = [1, 1]} : vector<8x128xf32> to vector<8x32xf32>
    %132 = arith.mulf %129, %98 : vector<8x32xf32>
    %133 = arith.mulf %128, %130 : vector<8x32xf32>
    %134 = arith.addf %132, %133 : vector<8x32xf32>
    %135 = math.tanh %134 : vector<8x32xf32>
    %136 = arith.mulf %131, %135 : vector<8x32xf32>
    %137 = tpu.concatenate %136, %118 in 1 : vector<8x32xf32>, vector<8x32xf32> -> vector<8x64xf32>
    %cst_26 = arith.constant dense<0.000000e+00> : vector<8x128xf32>
    %138 = tpu.matmul %137, %7, %cst_26 {dimension_numbers = #tpu.dot_dimension_numbers<[1], [0], [0], [1], [0, 0, 1, 1], [], []>} : vector<8x64xf32>, vector<64x128xf32>, vector<8x128xf32> -> vector<8x128xf32>
    %139 = arith.addf %138, %10 : vector<8x128xf32>
    %140 = arith.negf %139 : vector<8x128xf32>
    %141 = math.exp %140 : vector<8x128xf32>
    %cst_27 = arith.constant 1.000000e+00 : f32
    %142 = vector.broadcast %cst_27 : f32 to vector<8x128xf32>
    %143 = arith.addf %142, %141 : vector<8x128xf32>
    %144 = arith.divf %142, %143 : vector<8x128xf32>
    %145 = math.tanh %139 : vector<8x128xf32>
    %146 = vector.extract_strided_slice %144 {offsets = [0, 0], sizes = [8, 32], strides = [1, 1]} : vector<8x128xf32> to vector<8x32xf32>
    %147 = vector.extract_strided_slice %144 {offsets = [0, 32], sizes = [8, 32], strides = [1, 1]} : vector<8x128xf32> to vector<8x32xf32>
    %148 = vector.extract_strided_slice %145 {offsets = [0, 64], sizes = [8, 32], strides = [1, 1]} : vector<8x128xf32> to vector<8x32xf32>
    %149 = vector.extract_strided_slice %144 {offsets = [0, 96], sizes = [8, 32], strides = [1, 1]} : vector<8x128xf32> to vector<8x32xf32>
    %150 = arith.mulf %147, %116 : vector<8x32xf32>
    %151 = arith.mulf %146, %148 : vector<8x32xf32>
    %152 = arith.addf %150, %151 : vector<8x32xf32>
    %153 = math.tanh %152 : vector<8x32xf32>
    %154 = arith.mulf %149, %153 : vector<8x32xf32>
    %155 = vector.extract_strided_slice %5 {offsets = [32, 0], sizes = [8, 128], strides = [1, 1]} : vector<64x128xf32> to vector<8x128xf32>
    %cst_28 = arith.constant dense<0.000000e+00> : vector<8x128xf32>
    %156 = tpu.matmul %136, %6, %cst_28 {dimension_numbers = #tpu.dot_dimension_numbers<[1], [0], [0], [1], [0, 0, 1, 1], [], []>} : vector<8x32xf32>, vector<32x128xf32>, vector<8x128xf32> -> vector<8x128xf32>
    %157 = arith.addf %155, %156 : vector<8x128xf32>
    %158 = arith.negf %157 : vector<8x128xf32>
    %159 = math.exp %158 : vector<8x128xf32>
    %cst_29 = arith.constant 1.000000e+00 : f32
    %160 = vector.broadcast %cst_29 : f32 to vector<8x128xf32>
    %161 = arith.addf %160, %159 : vector<8x128xf32>
    %162 = arith.divf %160, %161 : vector<8x128xf32>
    %163 = math.tanh %157 : vector<8x128xf32>
    %164 = vector.extract_strided_slice %162 {offsets = [0, 0], sizes = [8, 32], strides = [1, 1]} : vector<8x128xf32> to vector<8x32xf32>
    %165 = vector.extract_strided_slice %162 {offsets = [0, 32], sizes = [8, 32], strides = [1, 1]} : vector<8x128xf32> to vector<8x32xf32>
    %166 = vector.extract_strided_slice %163 {offsets = [0, 64], sizes = [8, 32], strides = [1, 1]} : vector<8x128xf32> to vector<8x32xf32>
    %167 = vector.extract_strided_slice %162 {offsets = [0, 96], sizes = [8, 32], strides = [1, 1]} : vector<8x128xf32> to vector<8x32xf32>
    %168 = arith.mulf %165, %134 : vector<8x32xf32>
    %169 = arith.mulf %164, %166 : vector<8x32xf32>
    %170 = arith.addf %168, %169 : vector<8x32xf32>
    %171 = math.tanh %170 : vector<8x32xf32>
    %172 = arith.mulf %167, %171 : vector<8x32xf32>
    %173 = tpu.concatenate %172, %154 in 1 : vector<8x32xf32>, vector<8x32xf32> -> vector<8x64xf32>
    %cst_30 = arith.constant dense<0.000000e+00> : vector<8x128xf32>
    %174 = tpu.matmul %173, %7, %cst_30 {dimension_numbers = #tpu.dot_dimension_numbers<[1], [0], [0], [1], [0, 0, 1, 1], [], []>} : vector<8x64xf32>, vector<64x128xf32>, vector<8x128xf32> -> vector<8x128xf32>
    %175 = arith.addf %174, %10 : vector<8x128xf32>
    %176 = arith.negf %175 : vector<8x128xf32>
    %177 = math.exp %176 : vector<8x128xf32>
    %cst_31 = arith.constant 1.000000e+00 : f32
    %178 = vector.broadcast %cst_31 : f32 to vector<8x128xf32>
    %179 = arith.addf %178, %177 : vector<8x128xf32>
    %180 = arith.divf %178, %179 : vector<8x128xf32>
    %181 = math.tanh %175 : vector<8x128xf32>
    %182 = vector.extract_strided_slice %180 {offsets = [0, 0], sizes = [8, 32], strides = [1, 1]} : vector<8x128xf32> to vector<8x32xf32>
    %183 = vector.extract_strided_slice %180 {offsets = [0, 32], sizes = [8, 32], strides = [1, 1]} : vector<8x128xf32> to vector<8x32xf32>
    %184 = vector.extract_strided_slice %181 {offsets = [0, 64], sizes = [8, 32], strides = [1, 1]} : vector<8x128xf32> to vector<8x32xf32>
    %185 = vector.extract_strided_slice %180 {offsets = [0, 96], sizes = [8, 32], strides = [1, 1]} : vector<8x128xf32> to vector<8x32xf32>
    %186 = arith.mulf %183, %152 : vector<8x32xf32>
    %187 = arith.mulf %182, %184 : vector<8x32xf32>
    %188 = arith.addf %186, %187 : vector<8x32xf32>
    %189 = math.tanh %188 : vector<8x32xf32>
    %190 = arith.mulf %185, %189 : vector<8x32xf32>
    %191 = vector.extract_strided_slice %5 {offsets = [40, 0], sizes = [8, 128], strides = [1, 1]} : vector<64x128xf32> to vector<8x128xf32>
    %cst_32 = arith.constant dense<0.000000e+00> : vector<8x128xf32>
    %192 = tpu.matmul %172, %6, %cst_32 {dimension_numbers = #tpu.dot_dimension_numbers<[1], [0], [0], [1], [0, 0, 1, 1], [], []>} : vector<8x32xf32>, vector<32x128xf32>, vector<8x128xf32> -> vector<8x128xf32>
    %193 = arith.addf %191, %192 : vector<8x128xf32>
    %194 = arith.negf %193 : vector<8x128xf32>
    %195 = math.exp %194 : vector<8x128xf32>
    %cst_33 = arith.constant 1.000000e+00 : f32
    %196 = vector.broadcast %cst_33 : f32 to vector<8x128xf32>
    %197 = arith.addf %196, %195 : vector<8x128xf32>
    %198 = arith.divf %196, %197 : vector<8x128xf32>
    %199 = math.tanh %193 : vector<8x128xf32>
    %200 = vector.extract_strided_slice %198 {offsets = [0, 0], sizes = [8, 32], strides = [1, 1]} : vector<8x128xf32> to vector<8x32xf32>
    %201 = vector.extract_strided_slice %198 {offsets = [0, 32], sizes = [8, 32], strides = [1, 1]} : vector<8x128xf32> to vector<8x32xf32>
    %202 = vector.extract_strided_slice %199 {offsets = [0, 64], sizes = [8, 32], strides = [1, 1]} : vector<8x128xf32> to vector<8x32xf32>
    %203 = vector.extract_strided_slice %198 {offsets = [0, 96], sizes = [8, 32], strides = [1, 1]} : vector<8x128xf32> to vector<8x32xf32>
    %204 = arith.mulf %201, %170 : vector<8x32xf32>
    %205 = arith.mulf %200, %202 : vector<8x32xf32>
    %206 = arith.addf %204, %205 : vector<8x32xf32>
    %207 = math.tanh %206 : vector<8x32xf32>
    %208 = arith.mulf %203, %207 : vector<8x32xf32>
    %209 = tpu.concatenate %208, %190 in 1 : vector<8x32xf32>, vector<8x32xf32> -> vector<8x64xf32>
    %cst_34 = arith.constant dense<0.000000e+00> : vector<8x128xf32>
    %210 = tpu.matmul %209, %7, %cst_34 {dimension_numbers = #tpu.dot_dimension_numbers<[1], [0], [0], [1], [0, 0, 1, 1], [], []>} : vector<8x64xf32>, vector<64x128xf32>, vector<8x128xf32> -> vector<8x128xf32>
    %211 = arith.addf %210, %10 : vector<8x128xf32>
    %212 = arith.negf %211 : vector<8x128xf32>
    %213 = math.exp %212 : vector<8x128xf32>
    %cst_35 = arith.constant 1.000000e+00 : f32
    %214 = vector.broadcast %cst_35 : f32 to vector<8x128xf32>
    %215 = arith.addf %214, %213 : vector<8x128xf32>
    %216 = arith.divf %214, %215 : vector<8x128xf32>
    %217 = math.tanh %211 : vector<8x128xf32>
    %218 = vector.extract_strided_slice %216 {offsets = [0, 0], sizes = [8, 32], strides = [1, 1]} : vector<8x128xf32> to vector<8x32xf32>
    %219 = vector.extract_strided_slice %216 {offsets = [0, 32], sizes = [8, 32], strides = [1, 1]} : vector<8x128xf32> to vector<8x32xf32>
    %220 = vector.extract_strided_slice %217 {offsets = [0, 64], sizes = [8, 32], strides = [1, 1]} : vector<8x128xf32> to vector<8x32xf32>
    %221 = vector.extract_strided_slice %216 {offsets = [0, 96], sizes = [8, 32], strides = [1, 1]} : vector<8x128xf32> to vector<8x32xf32>
    %222 = arith.mulf %219, %188 : vector<8x32xf32>
    %223 = arith.mulf %218, %220 : vector<8x32xf32>
    %224 = arith.addf %222, %223 : vector<8x32xf32>
    %225 = math.tanh %224 : vector<8x32xf32>
    %226 = arith.mulf %221, %225 : vector<8x32xf32>
    %227 = vector.extract_strided_slice %5 {offsets = [48, 0], sizes = [8, 128], strides = [1, 1]} : vector<64x128xf32> to vector<8x128xf32>
    %cst_36 = arith.constant dense<0.000000e+00> : vector<8x128xf32>
    %228 = tpu.matmul %208, %6, %cst_36 {dimension_numbers = #tpu.dot_dimension_numbers<[1], [0], [0], [1], [0, 0, 1, 1], [], []>} : vector<8x32xf32>, vector<32x128xf32>, vector<8x128xf32> -> vector<8x128xf32>
    %229 = arith.addf %227, %228 : vector<8x128xf32>
    %230 = arith.negf %229 : vector<8x128xf32>
    %231 = math.exp %230 : vector<8x128xf32>
    %cst_37 = arith.constant 1.000000e+00 : f32
    %232 = vector.broadcast %cst_37 : f32 to vector<8x128xf32>
    %233 = arith.addf %232, %231 : vector<8x128xf32>
    %234 = arith.divf %232, %233 : vector<8x128xf32>
    %235 = math.tanh %229 : vector<8x128xf32>
    %236 = vector.extract_strided_slice %234 {offsets = [0, 0], sizes = [8, 32], strides = [1, 1]} : vector<8x128xf32> to vector<8x32xf32>
    %237 = vector.extract_strided_slice %234 {offsets = [0, 32], sizes = [8, 32], strides = [1, 1]} : vector<8x128xf32> to vector<8x32xf32>
    %238 = vector.extract_strided_slice %235 {offsets = [0, 64], sizes = [8, 32], strides = [1, 1]} : vector<8x128xf32> to vector<8x32xf32>
    %239 = vector.extract_strided_slice %234 {offsets = [0, 96], sizes = [8, 32], strides = [1, 1]} : vector<8x128xf32> to vector<8x32xf32>
    %240 = arith.mulf %237, %206 : vector<8x32xf32>
    %241 = arith.mulf %236, %238 : vector<8x32xf32>
    %242 = arith.addf %240, %241 : vector<8x32xf32>
    %243 = math.tanh %242 : vector<8x32xf32>
    %244 = arith.mulf %239, %243 : vector<8x32xf32>
    %245 = tpu.concatenate %244, %226 in 1 : vector<8x32xf32>, vector<8x32xf32> -> vector<8x64xf32>
    %cst_38 = arith.constant dense<0.000000e+00> : vector<8x128xf32>
    %246 = tpu.matmul %245, %7, %cst_38 {dimension_numbers = #tpu.dot_dimension_numbers<[1], [0], [0], [1], [0, 0, 1, 1], [], []>} : vector<8x64xf32>, vector<64x128xf32>, vector<8x128xf32> -> vector<8x128xf32>
    %247 = arith.addf %246, %10 : vector<8x128xf32>
    %248 = arith.negf %247 : vector<8x128xf32>
    %249 = math.exp %248 : vector<8x128xf32>
    %cst_39 = arith.constant 1.000000e+00 : f32
    %250 = vector.broadcast %cst_39 : f32 to vector<8x128xf32>
    %251 = arith.addf %250, %249 : vector<8x128xf32>
    %252 = arith.divf %250, %251 : vector<8x128xf32>
    %253 = math.tanh %247 : vector<8x128xf32>
    %254 = vector.extract_strided_slice %252 {offsets = [0, 0], sizes = [8, 32], strides = [1, 1]} : vector<8x128xf32> to vector<8x32xf32>
    %255 = vector.extract_strided_slice %252 {offsets = [0, 32], sizes = [8, 32], strides = [1, 1]} : vector<8x128xf32> to vector<8x32xf32>
    %256 = vector.extract_strided_slice %253 {offsets = [0, 64], sizes = [8, 32], strides = [1, 1]} : vector<8x128xf32> to vector<8x32xf32>
    %257 = vector.extract_strided_slice %252 {offsets = [0, 96], sizes = [8, 32], strides = [1, 1]} : vector<8x128xf32> to vector<8x32xf32>
    %258 = arith.mulf %255, %224 : vector<8x32xf32>
    %259 = arith.mulf %254, %256 : vector<8x32xf32>
    %260 = arith.addf %258, %259 : vector<8x32xf32>
    %261 = math.tanh %260 : vector<8x32xf32>
    %262 = arith.mulf %257, %261 : vector<8x32xf32>
    %263 = vector.extract_strided_slice %5 {offsets = [56, 0], sizes = [8, 128], strides = [1, 1]} : vector<64x128xf32> to vector<8x128xf32>
    %cst_40 = arith.constant dense<0.000000e+00> : vector<8x128xf32>
    %264 = tpu.matmul %244, %6, %cst_40 {dimension_numbers = #tpu.dot_dimension_numbers<[1], [0], [0], [1], [0, 0, 1, 1], [], []>} : vector<8x32xf32>, vector<32x128xf32>, vector<8x128xf32> -> vector<8x128xf32>
    %265 = arith.addf %263, %264 : vector<8x128xf32>
    %266 = arith.negf %265 : vector<8x128xf32>
    %267 = math.exp %266 : vector<8x128xf32>
    %cst_41 = arith.constant 1.000000e+00 : f32
    %268 = vector.broadcast %cst_41 : f32 to vector<8x128xf32>
    %269 = arith.addf %268, %267 : vector<8x128xf32>
    %270 = arith.divf %268, %269 : vector<8x128xf32>
    %271 = math.tanh %265 : vector<8x128xf32>
    %272 = vector.extract_strided_slice %270 {offsets = [0, 0], sizes = [8, 32], strides = [1, 1]} : vector<8x128xf32> to vector<8x32xf32>
    %273 = vector.extract_strided_slice %270 {offsets = [0, 32], sizes = [8, 32], strides = [1, 1]} : vector<8x128xf32> to vector<8x32xf32>
    %274 = vector.extract_strided_slice %271 {offsets = [0, 64], sizes = [8, 32], strides = [1, 1]} : vector<8x128xf32> to vector<8x32xf32>
    %275 = vector.extract_strided_slice %270 {offsets = [0, 96], sizes = [8, 32], strides = [1, 1]} : vector<8x128xf32> to vector<8x32xf32>
    %276 = arith.mulf %273, %242 : vector<8x32xf32>
    %277 = arith.mulf %272, %274 : vector<8x32xf32>
    %278 = arith.addf %276, %277 : vector<8x32xf32>
    %279 = math.tanh %278 : vector<8x32xf32>
    %280 = arith.mulf %275, %279 : vector<8x32xf32>
    %281 = tpu.concatenate %280, %262 in 1 : vector<8x32xf32>, vector<8x32xf32> -> vector<8x64xf32>
    %cst_42 = arith.constant dense<0.000000e+00> : vector<8x128xf32>
    %282 = tpu.matmul %281, %7, %cst_42 {dimension_numbers = #tpu.dot_dimension_numbers<[1], [0], [0], [1], [0, 0, 1, 1], [], []>} : vector<8x64xf32>, vector<64x128xf32>, vector<8x128xf32> -> vector<8x128xf32>
    %283 = arith.addf %282, %10 : vector<8x128xf32>
    %284 = arith.negf %283 : vector<8x128xf32>
    %285 = math.exp %284 : vector<8x128xf32>
    %cst_43 = arith.constant 1.000000e+00 : f32
    %286 = vector.broadcast %cst_43 : f32 to vector<8x128xf32>
    %287 = arith.addf %286, %285 : vector<8x128xf32>
    %288 = arith.divf %286, %287 : vector<8x128xf32>
    %289 = math.tanh %283 : vector<8x128xf32>
    %290 = vector.extract_strided_slice %288 {offsets = [0, 0], sizes = [8, 32], strides = [1, 1]} : vector<8x128xf32> to vector<8x32xf32>
    %291 = vector.extract_strided_slice %288 {offsets = [0, 32], sizes = [8, 32], strides = [1, 1]} : vector<8x128xf32> to vector<8x32xf32>
    %292 = vector.extract_strided_slice %289 {offsets = [0, 64], sizes = [8, 32], strides = [1, 1]} : vector<8x128xf32> to vector<8x32xf32>
    %293 = vector.extract_strided_slice %288 {offsets = [0, 96], sizes = [8, 32], strides = [1, 1]} : vector<8x128xf32> to vector<8x32xf32>
    %294 = arith.mulf %291, %260 : vector<8x32xf32>
    %295 = arith.mulf %290, %292 : vector<8x32xf32>
    %296 = arith.addf %294, %295 : vector<8x32xf32>
    %297 = math.tanh %296 : vector<8x32xf32>
    %298 = arith.mulf %293, %297 : vector<8x32xf32>
    %cst_44 = arith.constant 0.000000e+00 : f32
    %299 = vector.broadcast %cst_44 : f32 to vector<8x32xf32>
    %300 = arith.maximumf %298, %299 : vector<8x32xf32>
    %c0_45 = arith.constant 0 : index
    %c0_46 = arith.constant 0 : index
    %301 = vector.load %arg6[%c0_45, %c0_46] : memref<32x128xf32, #tpu.memory_space<vmem>>, vector<32x128xf32>
    %cst_47 = arith.constant dense<0.000000e+00> : vector<8x128xf32>
    %302 = tpu.matmul %300, %301, %cst_47 {dimension_numbers = #tpu.dot_dimension_numbers<[1], [0], [0], [1], [0, 0, 1, 1], [], []>} : vector<8x32xf32>, vector<32x128xf32>, vector<8x128xf32> -> vector<8x128xf32>
    %c0_48 = arith.constant 0 : index
    %c0_49 = arith.constant 0 : index
    %303 = vector.load %arg7[%c0_48, %c0_49] : memref<1x128xf32, #tpu.memory_space<vmem>>, vector<1x128xf32>
    %304 = vector.broadcast %303 : vector<1x128xf32> to vector<8x128xf32>
    %305 = arith.addf %302, %304 : vector<8x128xf32>
    %cst_50 = arith.constant 0.000000e+00 : f32
    %306 = vector.broadcast %cst_50 : f32 to vector<8x128xf32>
    %307 = arith.maximumf %305, %306 : vector<8x128xf32>
    %c0_51 = arith.constant 0 : index
    %c0_52 = arith.constant 0 : index
    %308 = vector.load %arg8[%c0_51, %c0_52] : memref<128x4xf32, #tpu.memory_space<vmem>>, vector<128x4xf32>
    %cst_53 = arith.constant dense<0.000000e+00> : vector<8x4xf32>
    %309 = tpu.matmul %307, %308, %cst_53 {dimension_numbers = #tpu.dot_dimension_numbers<[1], [0], [0], [1], [0, 0, 1, 1], [], []>} : vector<8x128xf32>, vector<128x4xf32>, vector<8x4xf32> -> vector<8x4xf32>
    %c0_54 = arith.constant 0 : index
    %c0_55 = arith.constant 0 : index
    %310 = vector.load %arg9[%c0_54, %c0_55] : memref<1x4xf32, #tpu.memory_space<vmem>>, vector<1x4xf32>
    %311 = vector.broadcast %310 : vector<1x4xf32> to vector<8x4xf32>
    %312 = arith.addf %309, %311 : vector<8x4xf32>
    %cst_56 = arith.constant dense<0xFF800000> : vector<8xf32>
    %313 = vector.multi_reduction <maximumf>, %312, %cst_56 [1] : vector<8x4xf32> to vector<8xf32>
    %314 = vector.shape_cast %313 : vector<8xf32> to vector<8x1xf32>
    %315 = vector.broadcast %314 : vector<8x1xf32> to vector<8x4xf32>
    %316 = arith.subf %312, %315 : vector<8x4xf32>
    %317 = math.exp %316 : vector<8x4xf32>
    %cst_57 = arith.constant dense<0.000000e+00> : vector<8xf32>
    %318 = vector.multi_reduction <add>, %317, %cst_57 [1] : vector<8x4xf32> to vector<8xf32>
    %319 = vector.shape_cast %318 : vector<8xf32> to vector<8x1xf32>
    %320 = vector.broadcast %319 : vector<8x1xf32> to vector<8x4xf32>
    %321 = arith.divf %317, %320 : vector<8x4xf32>
    %c0_58 = arith.constant 0 : index
    %c0_59 = arith.constant 0 : index
    %322 = vector.load %arg10[%c0_58, %c0_59] : memref<8x4xf32, #tpu.memory_space<vmem>>, vector<8x4xf32>
    tpu.vector_store %arg10[%c0_58, %c0_59], %321 {strides = array<i32>} : memref<8x4xf32, #tpu.memory_space<vmem>>, vector<8x4xf32>,
    return
  }
}

</mosaic_0001>

<llo_original>
// kernel: lstm_forward.1
$region0: #{lstm_forward.1}
  #allocation0 [shape = 'u32[]', space=smem, size = 0x4, offset = 0x4, fixed_abs, tag = 'smem constant byte address 0x4 - core index']
  #allocation1 [shape = 'u32[144,128]{1,0:T(1,128)}', space=vmem, size = 0x12000, scoped, tag = 'internal scratch']
  %s0 = inlined_call_operand.vmem [shape: f32[64,16], index: 0, kind: input, shape index: {}]
  %s1 = inlined_call_operand.vmem [shape: f32[16,128], index: 1, kind: input, shape index: {}]
  %s2 = inlined_call_operand.vmem [shape: f32[32,128], index: 2, kind: input, shape index: {}]
  %s3 = inlined_call_operand.vmem [shape: f32[1,128], index: 3, kind: input, shape index: {}]
  %s4 = inlined_call_operand.vmem [shape: f32[64,128], index: 4, kind: input, shape index: {}]
  %s5 = inlined_call_operand.vmem [shape: f32[1,128], index: 5, kind: input, shape index: {}]
  %s6 = inlined_call_operand.vmem [shape: f32[32,128], index: 6, kind: input, shape index: {}]
  %s7 = inlined_call_operand.vmem [shape: f32[1,128], index: 7, kind: input, shape index: {}]
  %s8 = inlined_call_operand.vmem [shape: f32[128,4], index: 8, kind: input, shape index: {}]
  %s9 = inlined_call_operand.vmem [shape: f32[1,4], index: 9, kind: input, shape index: {}]
  %s10 = inlined_call_operand.vmem [shape: f32[8,4], index: 10, kind: output, shape index: {}]
  %s11 = sld [smem:[#allocation0]]
  $region50: #{lstm_forward.1} parent=0
    _
  %s13 = ssub.s32 1, %s11
  %s14 = scalar_select 0, %s13, %s11
  // Predicated region
  $region2: #{lstm_forward.1} parent=0 // pred_check
    _
  $region3: #{lstm_forward.1} parent=0 // pred_check_branch
    %16 = sbr.rel (0) target = $region5
  $region4: #{lstm_forward.1} parent=0 // pred_region
    _
  $region5: #{lstm_forward.1} parent=0 // pred_fallthru
    _
  // Predicated region
  $region6: #{lstm_forward.1} parent=0 // pred_check
    _
  $region7: #{lstm_forward.1} parent=0 // pred_check_branch
    %18 = sbr.rel (0) target = $region9
  $region8: #{lstm_forward.1} parent=0 // pred_region
    _
  $region9: #{lstm_forward.1} parent=0 // pred_fallthru
    _
  // Predicated region
  $region10: #{lstm_forward.1} parent=0 // pred_check
    _
  $region11: #{lstm_forward.1} parent=0 // pred_check_branch
    %20 = sbr.rel (0) target = $region13
  $region12: #{lstm_forward.1} parent=0 // pred_region
    _
  $region13: #{lstm_forward.1} parent=0 // pred_fallthru
    _
  // Predicated region
  $region14: #{lstm_forward.1} parent=0 // pred_check
    _
  $region15: #{lstm_forward.1} parent=0 // pred_check_branch
    %22 = sbr.rel (0) target = $region17
  $region16: #{lstm_forward.1} parent=0 // pred_region
    _
  $region17: #{lstm_forward.1} parent=0 // pred_fallthru
    _
  // Predicated region
  $region18: #{lstm_forward.1} parent=0 // pred_check
    _
  $region19: #{lstm_forward.1} parent=0 // pred_check_branch
    %24 = sbr.rel (0) target = $region21
  $region20: #{lstm_forward.1} parent=0 // pred_region
    _
  $region21: #{lstm_forward.1} parent=0 // pred_fallthru
    _
  // Predicated region
  $region22: #{lstm_forward.1} parent=0 // pred_check
    _
  $region23: #{lstm_forward.1} parent=0 // pred_check_branch
    %26 = sbr.rel (0) target = $region25
  $region24: #{lstm_forward.1} parent=0 // pred_region
    _
  $region25: #{lstm_forward.1} parent=0 // pred_fallthru
    _
  // Predicated region
  $region26: #{lstm_forward.1} parent=0 // pred_check
    _
  $region27: #{lstm_forward.1} parent=0 // pred_check_branch
    %28 = sbr.rel (0) target = $region29
  $region28: #{lstm_forward.1} parent=0 // pred_region
    _
  $region29: #{lstm_forward.1} parent=0 // pred_fallthru
    _
  // Predicated region
  $region30: #{lstm_forward.1} parent=0 // pred_check
    _
  $region31: #{lstm_forward.1} parent=0 // pred_check_branch
    %30 = sbr.rel (0) target = $region33
  $region32: #{lstm_forward.1} parent=0 // pred_region
    _
  $region33: #{lstm_forward.1} parent=0 // pred_fallthru
    _
  // Predicated region
  $region34: #{lstm_forward.1} parent=0 // pred_check
    _
  $region35: #{lstm_forward.1} parent=0 // pred_check_branch
    %32 = sbr.rel (0) target = $region37
  $region36: #{lstm_forward.1} parent=0 // pred_region
    _
  $region37: #{lstm_forward.1} parent=0 // pred_fallthru
    _
  // Predicated region
  $region38: #{lstm_forward.1} parent=0 // pred_check
    _
  $region39: #{lstm_forward.1} parent=0 // pred_check_branch
    %34 = sbr.rel (0) target = $region41
  $region40: #{lstm_forward.1} parent=0 // pred_region
    _
  $region41: #{lstm_forward.1} parent=0 // pred_fallthru
    _
  %v35 = vld [vmem:[%s0] sm:$0xff]
  %v36 = vld [vmem:[%s0 + $0x8] sm:$0xff]
  %v37 = vld [vmem:[%s0 + $0x10] sm:$0xff]
  %v38 = vld [vmem:[%s0 + $0x18] sm:$0xff]
  %v39 = vld [vmem:[%s0 + $0x20] sm:$0xff]
  %v40 = vld [vmem:[%s0 + $0x28] sm:$0xff]
  %v41 = vld [vmem:[%s0 + $0x30] sm:$0xff]
  %v42 = vld [vmem:[%s0 + $0x38] sm:$0xff]
  %v43 = vld [vmem:[%s1] sm:$0xff]
  %v44 = vld [vmem:[%s1 + $0x8] sm:$0xff]
  %v45 = vld [vmem:[%s3] sm:$0x1]
  %v47 = vlaneseq
  %v48 = vshrl.u32 %v47, 7
  %v49 = vsub.s32 0, %v48
  %v50 = vrot.slane %v45, %v49
  %vm52 = vcmask 130048
  %v54 = vsel %vm52, %v35, 0
  %v57 = vsel %vm52, %v36, 0
  %v60 = vsel %vm52, %v37, 0
  %v63 = vsel %vm52, %v38, 0
  %v66 = vsel %vm52, %v39, 0
  %v69 = vsel %vm52, %v40, 0
  %v72 = vsel %vm52, %v41, 0
  %v75 = vsel %vm52, %v42, 0
  %77 = vmatprep.subr.mxu0 0.0
  %78 = vmatpush1.msra.mxu0 %v43
  %79 = vmatprep.subr.mxu0 0.0
  %80 = vmatpush1.msra.mxu0 %v44
  %81 = vmatprep.subr.mxu0 0.0
  %82 = vmatpush1.msra.mxu0 0.0
  %83 = vmatprep.subr.mxu0 0.0
  %84 = vmatpush1.msra.mxu0 0.0
  %85 = vmatprep.subr.mxu0 0.0
  %86 = vmatpush1.msra.mxu0 0.0
  %87 = vmatprep.subr.mxu0 0.0
  %88 = vmatpush1.msra.mxu0 0.0
  %89 = vmatprep.subr.mxu0 0.0
  %90 = vmatpush1.msra.mxu0 0.0
  %91 = vmatprep.subr.mxu0 0.0
  %92 = vmatpush1.msra.mxu0 0.0
  %93 = vmatprep.subr.mxu0 0.0
  %94 = vmatpush1.msra.mxu0 0.0
  %95 = vmatprep.subr.mxu0 0.0
  %96 = vmatpush1.msra.mxu0 0.0
  %97 = vmatprep.subr.mxu0 0.0
  %98 = vmatpush1.msra.mxu0 0.0
  %99 = vmatprep.subr.mxu0 0.0
  %100 = vmatpush1.msra.mxu0 0.0
  %101 = vmatprep.subr.mxu0 0.0
  %102 = vmatpush1.msra.mxu0 0.0
  %103 = vmatprep.subr.mxu0 0.0
  %104 = vmatpush1.msra.mxu0 0.0
  %105 = vmatprep.subr.mxu0 0.0
  %106 = vmatpush1.msra.mxu0 0.0
  %107 = vmatprep.subr.mxu0 0.0
  %108 = vmatpush1.msra.mxu0 0.0
  %109 = vmatprep.subr.mxu0 0.0
  %110 = vmatpush1.msra.mxu0 0.0
  %111 = vmatprep.subr.mxu0 0.0
  %112 = vmatpush1.msra.mxu0 0.0
  %113 = vmatprep.subr.mxu0 0.0
  %114 = vmatpush1.msra.mxu0 0.0
  %115 = vmatprep.subr.mxu0 0.0
  %116 = vmatpush1.msra.mxu0 0.0
  %117 = vmatprep.subr.mxu0 0.0
  %118 = vmatpush1.msra.mxu0 0.0
  %119 = vmatprep.subr.mxu0 0.0
  %120 = vmatpush1.msra.mxu0 0.0
  %121 = vmatprep.subr.mxu0 0.0
  %122 = vmatpush1.msra.mxu0 0.0
  %123 = vmatprep.subr.mxu0 0.0
  %124 = vmatpush1.msra.mxu0 0.0
  %125 = vmatprep.subr.mxu0 0.0
  %126 = vmatpush1.msra.mxu0 0.0
  %127 = vmatprep.subr.mxu0 0.0
  %128 = vmatpush1.msra.mxu0 0.0
  %129 = vmatprep.subr.mxu0 0.0
  %130 = vmatpush1.msra.mxu0 0.0
  %131 = vmatprep.subr.mxu0 0.0
  %132 = vmatpush1.msra.mxu0 0.0
  %133 = vmatprep.subr.mxu0 0.0
  %134 = vmatpush1.msra.mxu0 0.0
  %135 = vmatprep.subr.mxu0 0.0
  %136 = vmatpush1.msra.mxu0 0.0
  %137 = vmatprep.subr.mxu0 0.0
  %138 = vmatpush1.msra.mxu0 0.0
  %139 = vmatprep.subr.mxu0 0.0
  %140 = vmatpush1.msra.mxu0 0.0
  %141 = vmatprep.mubr.f32.mxu0 0.0
  %142 = vmatmul.mubr.f32.gmra.mrb[0].mxu0 %v54
  %v143 = vpop.f32.mrb[0].mxu0
  %v144 = vadd.f32 %v50, %v143
  %v145 = vpop.f32.mrb[0].mxu0
  %146 = vmatprep.mubr.f32.mxu0 0.0
  %147 = vmatmul.mubr.f32.gmra.mrb[0].mxu0 %v57
  %v148 = vpop.f32.mrb[0].mxu0
  %v149 = vadd.f32 %v50, %v148
  %v150 = vpop.f32.mrb[0].mxu0
  %151 = vmatprep.mubr.f32.mxu0 0.0
  %152 = vmatmul.mubr.f32.gmra.mrb[0].mxu0 %v60
  %v153 = vpop.f32.mrb[0].mxu0
  %v154 = vadd.f32 %v50, %v153
  %v155 = vpop.f32.mrb[0].mxu0
  %156 = vmatprep.mubr.f32.mxu0 0.0
  %157 = vmatmul.mubr.f32.gmra.mrb[0].mxu0 %v63
  %v158 = vpop.f32.mrb[0].mxu0
  %v159 = vadd.f32 %v50, %v158
  %v160 = vpop.f32.mrb[0].mxu0
  %161 = vmatprep.mubr.f32.mxu0 0.0
  %162 = vmatmul.mubr.f32.gmra.mrb[0].mxu0 %v66
  %v163 = vpop.f32.mrb[0].mxu0
  %v164 = vadd.f32 %v50, %v163
  %v165 = vpop.f32.mrb[0].mxu0
  %166 = vmatprep.mubr.f32.mxu0 0.0
  %167 = vmatmul.mubr.f32.gmra.mrb[0].mxu0 %v69
  %v168 = vpop.f32.mrb[0].mxu0
  %v169 = vadd.f32 %v50, %v168
  %v170 = vpop.f32.mrb[0].mxu0
  %171 = vmatprep.mubr.f32.mxu0 0.0
  %172 = vmatmul.mubr.f32.gmra.mrb[0].mxu0 %v72
  %v173 = vpop.f32.mrb[0].mxu0
  %v174 = vadd.f32 %v50, %v173
  %v175 = vpop.f32.mrb[0].mxu0
  %176 = vmatprep.mubr.f32.mxu0 0.0
  %177 = vmatmul.mubr.f32.gmra.mrb[0].mxu0 %v75
  %v178 = vpop.f32.mrb[0].mxu0
  %v179 = vadd.f32 %v50, %v178
  %v180 = vpop.f32.mrb[0].mxu0
  %181 = vdwg.mxu0
  %v182 = vld [vmem:[%s2] sm:$0xff]
  %v183 = vld [vmem:[%s2 + $0x8] sm:$0xff]
  %v184 = vld [vmem:[%s2 + $0x10] sm:$0xff]
  %v185 = vld [vmem:[%s2 + $0x18] sm:$0xff]
  %v186 = vld [vmem:[%s4] sm:$0xff]
  %v187 = vld [vmem:[%s4 + $0x8] sm:$0xff]
  %v188 = vld [vmem:[%s4 + $0x10] sm:$0xff]
  %v189 = vld [vmem:[%s4 + $0x18] sm:$0xff]
  %v190 = vld [vmem:[%s4 + $0x20] sm:$0xff]
  %v191 = vld [vmem:[%s4 + $0x28] sm:$0xff]
  %v192 = vld [vmem:[%s4 + $0x30] sm:$0xff]
  %v193 = vld [vmem:[%s4 + $0x38] sm:$0xff]
  %v194 = vld [vmem:[%s5] sm:$0x1]
  %v196 = vlaneseq
  %v197 = vshrl.u32 %v196, 7
  %v198 = vsub.s32 0, %v197
  %v199 = vrot.slane %v194, %v198
  %v201 = vxor.u32 %v144, 2147483648
  %v202 = vmul.f32 %v201, 1.442695
  %v203 = vpow.pop %v202
  %v204 = vadd.f32 %v203, 1.0
  %v205 = vrcp.pop %v204
  %v206 = vmul.f32 1.0, %v205
  %v207 = vtanh.pop %v144
  %v208 = vmul.f32 %v206, 0.0
  %210 = vrot.lane.b32.xlu0 %v207, 64
  %v211 = vpop.permute.xlu0 %210
  %v213 = vmul.f32 %v206, %v211
  %215 = vrot.lane.b32.xlu0 %v213, 32
  %v216 = vpop.permute.xlu0 %215
  %v218 = vadd.f32 %v208, %v216
  %v219 = vtanh.pop %v218
  %221 = vrot.lane.b32.xlu0 %v219, 64
  %v222 = vpop.permute.xlu0 %221
  %v224 = vmul.f32 %v206, %v222
  %226 = vrot.lane.b32.xlu0 %v224, 32
  %v227 = vpop.permute.xlu0 %226
  %vm228 = vcmask 261120
  %v229 = vsel %vm228, %v227, 0
  %231 = vmatprep.subr.mxu0 0.0
  %232 = vmatpush1.msra.mxu0 %v186
  %233 = vmatprep.subr.mxu0 0.0
  %234 = vmatpush1.msra.mxu0 %v187
  %235 = vmatprep.subr.mxu0 0.0
  %236 = vmatpush1.msra.mxu0 %v188
  %237 = vmatprep.subr.mxu0 0.0
  %238 = vmatpush1.msra.mxu0 %v189
  %239 = vmatprep.subr.mxu0 0.0
  %240 = vmatpush1.msra.mxu0 0.0
  %241 = vmatprep.subr.mxu0 0.0
  %242 = vmatpush1.msra.mxu0 0.0
  %243 = vmatprep.subr.mxu0 0.0
  %244 = vmatpush1.msra.mxu0 0.0
  %245 = vmatprep.subr.mxu0 0.0
  %246 = vmatpush1.msra.mxu0 0.0
  %247 = vmatprep.subr.mxu0 0.0
  %248 = vmatpush1.msra.mxu0 0.0
  %249 = vmatprep.subr.mxu0 0.0
  %250 = vmatpush1.msra.mxu0 0.0
  %251 = vmatprep.subr.mxu0 0.0
  %252 = vmatpush1.msra.mxu0 0.0
  %253 = vmatprep.subr.mxu0 0.0
  %254 = vmatpush1.msra.mxu0 0.0
  %255 = vmatprep.subr.mxu0 0.0
  %256 = vmatpush1.msra.mxu0 0.0
  %257 = vmatprep.subr.mxu0 0.0
  %258 = vmatpush1.msra.mxu0 0.0
  %259 = vmatprep.subr.mxu0 0.0
  %260 = vmatpush1.msra.mxu0 0.0
  %261 = vmatprep.subr.mxu0 0.0
  %262 = vmatpush1.msra.mxu0 0.0
  %263 = vmatprep.subr.mxu0 0.0
  %264 = vmatpush1.msra.mxu0 0.0
  %265 = vmatprep.subr.mxu0 0.0
  %266 = vmatpush1.msra.mxu0 0.0
  %267 = vmatprep.subr.mxu0 0.0
  %268 = vmatpush1.msra.mxu0 0.0
  %269 = vmatprep.subr.mxu0 0.0
  %270 = vmatpush1.msra.mxu0 0.0
  %271 = vmatprep.subr.mxu0 0.0
  %272 = vmatpush1.msra.mxu0 0.0
  %273 = vmatprep.subr.mxu0 0.0
  %274 = vmatpush1.msra.mxu0 0.0
  %275 = vmatprep.subr.mxu0 0.0
  %276 = vmatpush1.msra.mxu0 0.0
  %277 = vmatprep.subr.mxu0 0.0
  %278 = vmatpush1.msra.mxu0 0.0
  %279 = vmatprep.subr.mxu0 0.0
  %280 = vmatpush1.msra.mxu0 0.0
  %281 = vmatprep.subr.mxu0 0.0
  %282 = vmatpush1.msra.mxu0 0.0
  %283 = vmatprep.subr.mxu0 0.0
  %284 = vmatpush1.msra.mxu0 0.0
  %285 = vmatprep.subr.mxu0 0.0
  %286 = vmatpush1.msra.mxu0 0.0
  %287 = vmatprep.subr.mxu0 0.0
  %288 = vmatpush1.msra.mxu0 0.0
  %289 = vmatprep.subr.mxu0 0.0
  %290 = vmatpush1.msra.mxu0 0.0
  %291 = vmatprep.subr.mxu0 0.0
  %292 = vmatpush1.msra.mxu0 0.0
  %293 = vmatprep.subr.mxu0 0.0
  %294 = vmatpush1.msra.mxu0 0.0
  %295 = vmatprep.mubr.f32.mxu0 0.0
  %296 = vmatmul.mubr.f32.gmra.mrb[0].mxu0 %v229
  %v297 = vpop.f32.mrb[0].mxu0
  %v298 = vadd.f32 %v199, %v297
  %v299 = vpop.f32.mrb[0].mxu0
  %300 = vdwg.mxu0
  %v301 = vxor.u32 %v298, 2147483648
  %v302 = vmul.f32 %v301, 1.442695
  %v303 = vpow.pop %v302
  %v304 = vadd.f32 %v303, 1.0
  %v305 = vrcp.pop %v304
  %v306 = vmul.f32 1.0, %v305
  %v307 = vtanh.pop %v298
  %v308 = vmul.f32 %v306, 0.0
  %310 = vrot.lane.b32.xlu0 %v307, 64
  %v311 = vpop.permute.xlu0 %310
  %v313 = vmul.f32 %v306, %v311
  %315 = vrot.lane.b32.xlu0 %v313, 32
  %v316 = vpop.permute.xlu0 %315
  %v318 = vadd.f32 %v308, %v316
  %v319 = vtanh.pop %v318
  %321 = vrot.lane.b32.xlu0 %v319, 64
  %v322 = vpop.permute.xlu0 %321
  %v324 = vmul.f32 %v306, %v322
  %325 = vmatprep.subr.mxu0 0.0
  %326 = vmatpush1.msra.mxu0 %v182
  %327 = vmatprep.subr.mxu0 0.0
  %328 = vmatpush1.msra.mxu0 %v183
  %329 = vmatprep.subr.mxu0 0.0
  %330 = vmatpush1.msra.mxu0 %v184
  %331 = vmatprep.subr.mxu0 0.0
  %332 = vmatpush1.msra.mxu0 %v185
  %333 = vmatprep.subr.mxu0 0.0
  %334 = vmatpush1.msra.mxu0 0.0
  %335 = vmatprep.subr.mxu0 0.0
  %336 = vmatpush1.msra.mxu0 0.0
  %337 = vmatprep.subr.mxu0 0.0
  %338 = vmatpush1.msra.mxu0 0.0
  %339 = vmatprep.subr.mxu0 0.0
  %340 = vmatpush1.msra.mxu0 0.0
  %341 = vmatprep.subr.mxu0 0.0
  %342 = vmatpush1.msra.mxu0 0.0
  %343 = vmatprep.subr.mxu0 0.0
  %344 = vmatpush1.msra.mxu0 0.0
  %345 = vmatprep.subr.mxu0 0.0
  %346 = vmatpush1.msra.mxu0 0.0
  %347 = vmatprep.subr.mxu0 0.0
  %348 = vmatpush1.msra.mxu0 0.0
  %349 = vmatprep.subr.mxu0 0.0
  %350 = vmatpush1.msra.mxu0 0.0
  %351 = vmatprep.subr.mxu0 0.0
  %352 = vmatpush1.msra.mxu0 0.0
  %353 = vmatprep.subr.mxu0 0.0
  %354 = vmatpush1.msra.mxu0 0.0
  %355 = vmatprep.subr.mxu0 0.0
  %356 = vmatpush1.msra.mxu0 0.0
  %357 = vmatprep.subr.mxu0 0.0
  %358 = vmatpush1.msra.mxu0 0.0
  %359 = vmatprep.subr.mxu0 0.0
  %360 = vmatpush1.msra.mxu0 0.0
  %361 = vmatprep.subr.mxu0 0.0
  %362 = vmatpush1.msra.mxu0 0.0
  %363 = vmatprep.subr.mxu0 0.0
  %364 = vmatpush1.msra.mxu0 0.0
  %365 = vmatprep.subr.mxu0 0.0
  %366 = vmatpush1.msra.mxu0 0.0
  %367 = vmatprep.subr.mxu0 0.0
  %368 = vmatpush1.msra.mxu0 0.0
  %369 = vmatprep.subr.mxu0 0.0
  %370 = vmatpush1.msra.mxu0 0.0
  %371 = vmatprep.subr.mxu0 0.0
  %372 = vmatpush1.msra.mxu0 0.0
  %373 = vmatprep.subr.mxu0 0.0
  %374 = vmatpush1.msra.mxu0 0.0
  %375 = vmatprep.subr.mxu0 0.0
  %376 = vmatpush1.msra.mxu0 0.0
  %377 = vmatprep.subr.mxu0 0.0
  %378 = vmatpush1.msra.mxu0 0.0
  %379 = vmatprep.subr.mxu0 0.0
  %380 = vmatpush1.msra.mxu0 0.0
  %381 = vmatprep.subr.mxu0 0.0
  %382 = vmatpush1.msra.mxu0 0.0
  %383 = vmatprep.subr.mxu0 0.0
  %384 = vmatpush1.msra.mxu0 0.0
  %385 = vmatprep.subr.mxu0 0.0
  %386 = vmatpush1.msra.mxu0 0.0
  %387 = vmatprep.subr.mxu0 0.0
  %388 = vmatpush1.msra.mxu0 0.0
  %389 = vmatprep.mubr.f32.mxu0 0.0
  %390 = vmatmul.mubr.f32.gmra.mrb[0].mxu0 %v229
  %v391 = vpop.f32.mrb[0].mxu0
  %v392 = vadd.f32 0.0, %v391
  %v393 = vpop.f32.mrb[0].mxu0
  %394 = vdwg.mxu0
  %v395 = vadd.f32 %v149, %v392
  %v396 = vxor.u32 %v395, 2147483648
  %v397 = vmul.f32 %v396, 1.442695
  %v398 = vpow.pop %v397
  %v399 = vadd.f32 %v398, 1.0
  %v400 = vrcp.pop %v399
  %v401 = vmul.f32 1.0, %v400
  %v402 = vtanh.pop %v395
  %v403 = vmul.f32 %v401, %v218
  %405 = vrot.lane.b32.xlu0 %v402, 64
  %v406 = vpop.permute.xlu0 %405
  %v408 = vmul.f32 %v401, %v406
  %410 = vrot.lane.b32.xlu0 %v408, 32
  %v411 = vpop.permute.xlu0 %410
  %v413 = vadd.f32 %v403, %v411
  %v414 = vtanh.pop %v413
  %416 = vrot.lane.b32.xlu0 %v414, 64
  %v417 = vpop.permute.xlu0 %416
  %v419 = vmul.f32 %v401, %v417
  %421 = vrot.lane.b32.xlu0 %v419, 32
  %v422 = vpop.permute.xlu0 %421
  %425 = vrot.lane.b32.xlu0 %v324, 64
  %v426 = vpop.permute.xlu0 %425
  %v428 = vsel %vm228, %v422, %v426
  %vm429 = vcmask 523264
  %v431 = vsel %vm429, %v428, 0
  %433 = vmatprep.subr.mxu0 0.0
  %434 = vmatpush1.msra.mxu0 %v186
  %435 = vmatprep.subr.mxu0 0.0
  %436 = vmatpush1.msra.mxu0 %v187
  %437 = vmatprep.subr.mxu0 0.0
  %438 = vmatpush1.msra.mxu0 %v188
  %439 = vmatprep.subr.mxu0 0.0
  %440 = vmatpush1.msra.mxu0 %v189
  %441 = vmatprep.subr.mxu0 0.0
  %442 = vmatpush1.msra.mxu0 %v190
  %443 = vmatprep.subr.mxu0 0.0
  %444 = vmatpush1.msra.mxu0 %v191
  %445 = vmatprep.subr.mxu0 0.0
  %446 = vmatpush1.msra.mxu0 %v192
  %447 = vmatprep.subr.mxu0 0.0
  %448 = vmatpush1.msra.mxu0 %v193
  %449 = vmatprep.subr.mxu0 0.0
  %450 = vmatpush1.msra.mxu0 0.0
  %451 = vmatprep.subr.mxu0 0.0
  %452 = vmatpush1.msra.mxu0 0.0
  %453 = vmatprep.subr.mxu0 0.0
  %454 = vmatpush1.msra.mxu0 0.0
  %455 = vmatprep.subr.mxu0 0.0
  %456 = vmatpush1.msra.mxu0 0.0
  %457 = vmatprep.subr.mxu0 0.0
  %458 = vmatpush1.msra.mxu0 0.0
  %459 = vmatprep.subr.mxu0 0.0
  %460 = vmatpush1.msra.mxu0 0.0
  %461 = vmatprep.subr.mxu0 0.0
  %462 = vmatpush1.msra.mxu0 0.0
  %463 = vmatprep.subr.mxu0 0.0
  %464 = vmatpush1.msra.mxu0 0.0
  %465 = vmatprep.subr.mxu0 0.0
  %466 = vmatpush1.msra.mxu0 0.0
  %467 = vmatprep.subr.mxu0 0.0
  %468 = vmatpush1.msra.mxu0 0.0
  %469 = vmatprep.subr.mxu0 0.0
  %470 = vmatpush1.msra.mxu0 0.0
  %471 = vmatprep.subr.mxu0 0.0
  %472 = vmatpush1.msra.mxu0 0.0
  %473 = vmatprep.subr.mxu0 0.0
  %474 = vmatpush1.msra.mxu0 0.0
  %475 = vmatprep.subr.mxu0 0.0
  %476 = vmatpush1.msra.mxu0 0.0
  %477 = vmatprep.subr.mxu0 0.0
  %478 = vmatpush1.msra.mxu0 0.0
  %479 = vmatprep.subr.mxu0 0.0
  %480 = vmatpush1.msra.mxu0 0.0
  %481 = vmatprep.subr.mxu0 0.0
  %482 = vmatpush1.msra.mxu0 0.0
  %483 = vmatprep.subr.mxu0 0.0
  %484 = vmatpush1.msra.mxu0 0.0
  %485 = vmatprep.subr.mxu0 0.0
  %486 = vmatpush1.msra.mxu0 0.0
  %487 = vmatprep.subr.mxu0 0.0
  %488 = vmatpush1.msra.mxu0 0.0
  %489 = vmatprep.subr.mxu0 0.0
  %490 = vmatpush1.msra.mxu0 0.0
  %491 = vmatprep.subr.mxu0 0.0
  %492 = vmatpush1.msra.mxu0 0.0
  %493 = vmatprep.subr.mxu0 0.0
  %494 = vmatpush1.msra.mxu0 0.0
  %495 = vmatprep.subr.mxu0 0.0
  %496 = vmatpush1.msra.mxu0 0.0
  %497 = vmatprep.mubr.f32.mxu0 0.0
  %498 = vmatmul.mubr.f32.gmra.mrb[0].mxu0 %v431
  %v499 = vpop.f32.mrb[0].mxu0
  %v500 = vadd.f32 %v199, %v499
  %v501 = vpop.f32.mrb[0].mxu0
  %502 = vdwg.mxu0
  %v503 = vxor.u32 %v500, 2147483648
  %v504 = vmul.f32 %v503, 1.442695
  %v505 = vpow.pop %v504
  %v506 = vadd.f32 %v505, 1.0
  %v507 = vrcp.pop %v506
  %v508 = vmul.f32 1.0, %v507
  %v509 = vtanh.pop %v500
  %v510 = vmul.f32 %v508, %v318
  %512 = vrot.lane.b32.xlu0 %v509, 64
  %v513 = vpop.permute.xlu0 %512
  %v515 = vmul.f32 %v508, %v513
  %517 = vrot.lane.b32.xlu0 %v515, 32
  %v518 = vpop.permute.xlu0 %517
  %v520 = vadd.f32 %v510, %v518
  %v521 = vtanh.pop %v520
  %523 = vrot.lane.b32.xlu0 %v521, 64
  %v524 = vpop.permute.xlu0 %523
  %v526 = vmul.f32 %v508, %v524
  %v527 = vsel %vm228, %v422, 0
  %529 = vmatprep.subr.mxu0 0.0
  %530 = vmatpush1.msra.mxu0 %v182
  %531 = vmatprep.subr.mxu0 0.0
  %532 = vmatpush1.msra.mxu0 %v183
  %533 = vmatprep.subr.mxu0 0.0
  %534 = vmatpush1.msra.mxu0 %v184
  %535 = vmatprep.subr.mxu0 0.0
  %536 = vmatpush1.msra.mxu0 %v185
  %537 = vmatprep.subr.mxu0 0.0
  %538 = vmatpush1.msra.mxu0 0.0
  %539 = vmatprep.subr.mxu0 0.0
  %540 = vmatpush1.msra.mxu0 0.0
  %541 = vmatprep.subr.mxu0 0.0
  %542 = vmatpush1.msra.mxu0 0.0
  %543 = vmatprep.subr.mxu0 0.0
  %544 = vmatpush1.msra.mxu0 0.0
  %545 = vmatprep.subr.mxu0 0.0
  %546 = vmatpush1.msra.mxu0 0.0
  %547 = vmatprep.subr.mxu0 0.0
  %548 = vmatpush1.msra.mxu0 0.0
  %549 = vmatprep.subr.mxu0 0.0
  %550 = vmatpush1.msra.mxu0 0.0
  %551 = vmatprep.subr.mxu0 0.0
  %552 = vmatpush1.msra.mxu0 0.0
  %553 = vmatprep.subr.mxu0 0.0
  %554 = vmatpush1.msra.mxu0 0.0
  %555 = vmatprep.subr.mxu0 0.0
  %556 = vmatpush1.msra.mxu0 0.0
  %557 = vmatprep.subr.mxu0 0.0
  %558 = vmatpush1.msra.mxu0 0.0
  %559 = vmatprep.subr.mxu0 0.0
  %560 = vmatpush1.msra.mxu0 0.0
  %561 = vmatprep.subr.mxu0 0.0
  %562 = vmatpush1.msra.mxu0 0.0
  %563 = vmatprep.subr.mxu0 0.0
  %564 = vmatpush1.msra.mxu0 0.0
  %565 = vmatprep.subr.mxu0 0.0
  %566 = vmatpush1.msra.mxu0 0.0
  %567 = vmatprep.subr.mxu0 0.0
  %568 = vmatpush1.msra.mxu0 0.0
  %569 = vmatprep.subr.mxu0 0.0
  %570 = vmatpush1.msra.mxu0 0.0
  %571 = vmatprep.subr.mxu0 0.0
  %572 = vmatpush1.msra.mxu0 0.0
  %573 = vmatprep.subr.mxu0 0.0
  %574 = vmatpush1.msra.mxu0 0.0
  %575 = vmatprep.subr.mxu0 0.0
  %576 = vmatpush1.msra.mxu0 0.0
  %577 = vmatprep.subr.mxu0 0.0
  %578 = vmatpush1.msra.mxu0 0.0
  %579 = vmatprep.subr.mxu0 0.0
  %580 = vmatpush1.msra.mxu0 0.0
  %581 = vmatprep.subr.mxu0 0.0
  %582 = vmatpush1.msra.mxu0 0.0
  %583 = vmatprep.subr.mxu0 0.0
  %584 = vmatpush1.msra.mxu0 0.0
  %585 = vmatprep.subr.mxu0 0.0
  %586 = vmatpush1.msra.mxu0 0.0
  %587 = vmatprep.subr.mxu0 0.0
  %588 = vmatpush1.msra.mxu0 0.0
  %589 = vmatprep.subr.mxu0 0.0
  %590 = vmatpush1.msra.mxu0 0.0
  %591 = vmatprep.subr.mxu0 0.0
  %592 = vmatpush1.msra.mxu0 0.0
  %593 = vmatprep.mubr.f32.mxu0 0.0
  %594 = vmatmul.mubr.f32.gmra.mrb[0].mxu0 %v527
  %v595 = vpop.f32.mrb[0].mxu0
  %v596 = vadd.f32 0.0, %v595
  %v597 = vpop.f32.mrb[0].mxu0
  %598 = vdwg.mxu0
  %v599 = vadd.f32 %v154, %v596
  %v600 = vxor.u32 %v599, 2147483648
  %v601 = vmul.f32 %v600, 1.442695
  %v602 = vpow.pop %v601
  %v603 = vadd.f32 %v602, 1.0
  %v604 = vrcp.pop %v603
  %v605 = vmul.f32 1.0, %v604
  %v606 = vtanh.pop %v599
  %v607 = vmul.f32 %v605, %v413
  %609 = vrot.lane.b32.xlu0 %v606, 64
  %v610 = vpop.permute.xlu0 %609
  %v612 = vmul.f32 %v605, %v610
  %614 = vrot.lane.b32.xlu0 %v612, 32
  %v615 = vpop.permute.xlu0 %614
  %v617 = vadd.f32 %v607, %v615
  %v618 = vtanh.pop %v617
  %620 = vrot.lane.b32.xlu0 %v618, 64
  %v621 = vpop.permute.xlu0 %620
  %v623 = vmul.f32 %v605, %v621
  %625 = vrot.lane.b32.xlu0 %v623, 32
  %v626 = vpop.permute.xlu0 %625
  %629 = vrot.lane.b32.xlu0 %v526, 64
  %v630 = vpop.permute.xlu0 %629
  %v632 = vsel %vm228, %v626, %v630
  %v634 = vsel %vm429, %v632, 0
  %636 = vmatprep.subr.mxu0 0.0
  %637 = vmatpush1.msra.mxu0 %v186
  %638 = vmatprep.subr.mxu0 0.0
  %639 = vmatpush1.msra.mxu0 %v187
  %640 = vmatprep.subr.mxu0 0.0
  %641 = vmatpush1.msra.mxu0 %v188
  %642 = vmatprep.subr.mxu0 0.0
  %643 = vmatpush1.msra.mxu0 %v189
  %644 = vmatprep.subr.mxu0 0.0
  %645 = vmatpush1.msra.mxu0 %v190
  %646 = vmatprep.subr.mxu0 0.0
  %647 = vmatpush1.msra.mxu0 %v191
  %648 = vmatprep.subr.mxu0 0.0
  %649 = vmatpush1.msra.mxu0 %v192
  %650 = vmatprep.subr.mxu0 0.0
  %651 = vmatpush1.msra.mxu0 %v193
  %652 = vmatprep.subr.mxu0 0.0
  %653 = vmatpush1.msra.mxu0 0.0
  %654 = vmatprep.subr.mxu0 0.0
  %655 = vmatpush1.msra.mxu0 0.0
  %656 = vmatprep.subr.mxu0 0.0
  %657 = vmatpush1.msra.mxu0 0.0
  %658 = vmatprep.subr.mxu0 0.0
  %659 = vmatpush1.msra.mxu0 0.0
  %660 = vmatprep.subr.mxu0 0.0
  %661 = vmatpush1.msra.mxu0 0.0
  %662 = vmatprep.subr.mxu0 0.0
  %663 = vmatpush1.msra.mxu0 0.0
  %664 = vmatprep.subr.mxu0 0.0
  %665 = vmatpush1.msra.mxu0 0.0
  %666 = vmatprep.subr.mxu0 0.0
  %667 = vmatpush1.msra.mxu0 0.0
  %668 = vmatprep.subr.mxu0 0.0
  %669 = vmatpush1.msra.mxu0 0.0
  %670 = vmatprep.subr.mxu0 0.0
  %671 = vmatpush1.msra.mxu0 0.0
  %672 = vmatprep.subr.mxu0 0.0
  %673 = vmatpush1.msra.mxu0 0.0
  %674 = vmatprep.subr.mxu0 0.0
  %675 = vmatpush1.msra.mxu0 0.0
  %676 = vmatprep.subr.mxu0 0.0
  %677 = vmatpush1.msra.mxu0 0.0
  %678 = vmatprep.subr.mxu0 0.0
  %679 = vmatpush1.msra.mxu0 0.0
  %680 = vmatprep.subr.mxu0 0.0
  %681 = vmatpush1.msra.mxu0 0.0
  %682 = vmatprep.subr.mxu0 0.0
  %683 = vmatpush1.msra.mxu0 0.0
  %684 = vmatprep.subr.mxu0 0.0
  %685 = vmatpush1.msra.mxu0 0.0
  %686 = vmatprep.subr.mxu0 0.0
  %687 = vmatpush1.msra.mxu0 0.0
  %688 = vmatprep.subr.mxu0 0.0
  %689 = vmatpush1.msra.mxu0 0.0
  %690 = vmatprep.subr.mxu0 0.0
  %691 = vmatpush1.msra.mxu0 0.0
  %692 = vmatprep.subr.mxu0 0.0
  %693 = vmatpush1.msra.mxu0 0.0
  %694 = vmatprep.subr.mxu0 0.0
  %695 = vmatpush1.msra.mxu0 0.0
  %696 = vmatprep.subr.mxu0 0.0
  %697 = vmatpush1.msra.mxu0 0.0
  %698 = vmatprep.subr.mxu0 0.0
  %699 = vmatpush1.msra.mxu0 0.0
  %700 = vmatprep.mubr.f32.mxu0 0.0
  %701 = vmatmul.mubr.f32.gmra.mrb[0].mxu0 %v634
  %v702 = vpop.f32.mrb[0].mxu0
  %v703 = vadd.f32 %v199, %v702
  %v704 = vpop.f32.mrb[0].mxu0
  %705 = vdwg.mxu0
  %v706 = vxor.u32 %v703, 2147483648
  %v707 = vmul.f32 %v706, 1.442695
  %v708 = vpow.pop %v707
  %v709 = vadd.f32 %v708, 1.0
  %v710 = vrcp.pop %v709
  %v711 = vmul.f32 1.0, %v710
  %v712 = vtanh.pop %v703
  %v713 = vmul.f32 %v711, %v520
  %715 = vrot.lane.b32.xlu0 %v712, 64
  %v716 = vpop.permute.xlu0 %715
  %v718 = vmul.f32 %v711, %v716
  %720 = vrot.lane.b32.xlu0 %v718, 32
  %v721 = vpop.permute.xlu0 %720
  %v723 = vadd.f32 %v713, %v721
  %v724 = vtanh.pop %v723
  %726 = vrot.lane.b32.xlu0 %v724, 64
  %v727 = vpop.permute.xlu0 %726
  %v729 = vmul.f32 %v711, %v727
  %v730 = vsel %vm228, %v626, 0
  %732 = vmatprep.subr.mxu0 0.0
  %733 = vmatpush1.msra.mxu0 %v182
  %734 = vmatprep.subr.mxu0 0.0
  %735 = vmatpush1.msra.mxu0 %v183
  %736 = vmatprep.subr.mxu0 0.0
  %737 = vmatpush1.msra.mxu0 %v184
  %738 = vmatprep.subr.mxu0 0.0
  %739 = vmatpush1.msra.mxu0 %v185
  %740 = vmatprep.subr.mxu0 0.0
  %741 = vmatpush1.msra.mxu0 0.0
  %742 = vmatprep.subr.mxu0 0.0
  %743 = vmatpush1.msra.mxu0 0.0
  %744 = vmatprep.subr.mxu0 0.0
  %745 = vmatpush1.msra.mxu0 0.0
  %746 = vmatprep.subr.mxu0 0.0
  %747 = vmatpush1.msra.mxu0 0.0
  %748 = vmatprep.subr.mxu0 0.0
  %749 = vmatpush1.msra.mxu0 0.0
  %750 = vmatprep.subr.mxu0 0.0
  %751 = vmatpush1.msra.mxu0 0.0
  %752 = vmatprep.subr.mxu0 0.0
  %753 = vmatpush1.msra.mxu0 0.0
  %754 = vmatprep.subr.mxu0 0.0
  %755 = vmatpush1.msra.mxu0 0.0
  %756 = vmatprep.subr.mxu0 0.0
  %757 = vmatpush1.msra.mxu0 0.0
  %758 = vmatprep.subr.mxu0 0.0
  %759 = vmatpush1.msra.mxu0 0.0
  %760 = vmatprep.subr.mxu0 0.0
  %761 = vmatpush1.msra.mxu0 0.0
  %762 = vmatprep.subr.mxu0 0.0
  %763 = vmatpush1.msra.mxu0 0.0
  %764 = vmatprep.subr.mxu0 0.0
  %765 = vmatpush1.msra.mxu0 0.0
  %766 = vmatprep.subr.mxu0 0.0
  %767 = vmatpush1.msra.mxu0 0.0
  %768 = vmatprep.subr.mxu0 0.0
  %769 = vmatpush1.msra.mxu0 0.0
  %770 = vmatprep.subr.mxu0 0.0
  %771 = vmatpush1.msra.mxu0 0.0
  %772 = vmatprep.subr.mxu0 0.0
  %773 = vmatpush1.msra.mxu0 0.0
  %774 = vmatprep.subr.mxu0 0.0
  %775 = vmatpush1.msra.mxu0 0.0
  %776 = vmatprep.subr.mxu0 0.0
  %777 = vmatpush1.msra.mxu0 0.0
  %778 = vmatprep.subr.mxu0 0.0
  %779 = vmatpush1.msra.mxu0 0.0
  %780 = vmatprep.subr.mxu0 0.0
  %781 = vmatpush1.msra.mxu0 0.0
  %782 = vmatprep.subr.mxu0 0.0
  %783 = vmatpush1.msra.mxu0 0.0
  %784 = vmatprep.subr.mxu0 0.0
  %785 = vmatpush1.msra.mxu0 0.0
  %786 = vmatprep.subr.mxu0 0.0
  %787 = vmatpush1.msra.mxu0 0.0
  %788 = vmatprep.subr.mxu0 0.0
  %789 = vmatpush1.msra.mxu0 0.0
  %790 = vmatprep.subr.mxu0 0.0
  %791 = vmatpush1.msra.mxu0 0.0
  %792 = vmatprep.subr.mxu0 0.0
  %793 = vmatpush1.msra.mxu0 0.0
  %794 = vmatprep.subr.mxu0 0.0
  %795 = vmatpush1.msra.mxu0 0.0
  %796 = vmatprep.mubr.f32.mxu0 0.0
  %797 = vmatmul.mubr.f32.gmra.mrb[0].mxu0 %v730
  %v798 = vpop.f32.mrb[0].mxu0
  %v799 = vadd.f32 0.0, %v798
  %v800 = vpop.f32.mrb[0].mxu0
  %801 = vdwg.mxu0
  %v802 = vadd.f32 %v159, %v799
  %v803 = vxor.u32 %v802, 2147483648
  %v804 = vmul.f32 %v803, 1.442695
  %v805 = vpow.pop %v804
  %v806 = vadd.f32 %v805, 1.0
  %v807 = vrcp.pop %v806
  %v808 = vmul.f32 1.0, %v807
  %v809 = vtanh.pop %v802
  %v810 = vmul.f32 %v808, %v617
  %812 = vrot.lane.b32.xlu0 %v809, 64
  %v813 = vpop.permute.xlu0 %812
  %v815 = vmul.f32 %v808, %v813
  %817 = vrot.lane.b32.xlu0 %v815, 32
  %v818 = vpop.permute.xlu0 %817
  %v820 = vadd.f32 %v810, %v818
  %v821 = vtanh.pop %v820
  %823 = vrot.lane.b32.xlu0 %v821, 64
  %v824 = vpop.permute.xlu0 %823
  %v826 = vmul.f32 %v808, %v824
  %828 = vrot.lane.b32.xlu0 %v826, 32
  %v829 = vpop.permute.xlu0 %828
  %832 = vrot.lane.b32.xlu0 %v729, 64
  %v833 = vpop.permute.xlu0 %832
  %v835 = vsel %vm228, %v829, %v833
  %v837 = vsel %vm429, %v835, 0
  %839 = vmatprep.subr.mxu0 0.0
  %840 = vmatpush1.msra.mxu0 %v186
  %841 = vmatprep.subr.mxu0 0.0
  %842 = vmatpush1.msra.mxu0 %v187
  %843 = vmatprep.subr.mxu0 0.0
  %844 = vmatpush1.msra.mxu0 %v188
  %845 = vmatprep.subr.mxu0 0.0
  %846 = vmatpush1.msra.mxu0 %v189
  %847 = vmatprep.subr.mxu0 0.0
  %848 = vmatpush1.msra.mxu0 %v190
  %849 = vmatprep.subr.mxu0 0.0
  %850 = vmatpush1.msra.mxu0 %v191
  %851 = vmatprep.subr.mxu0 0.0
  %852 = vmatpush1.msra.mxu0 %v192
  %853 = vmatprep.subr.mxu0 0.0
  %854 = vmatpush1.msra.mxu0 %v193
  %855 = vmatprep.subr.mxu0 0.0
  %856 = vmatpush1.msra.mxu0 0.0
  %857 = vmatprep.subr.mxu0 0.0
  %858 = vmatpush1.msra.mxu0 0.0
  %859 = vmatprep.subr.mxu0 0.0
  %860 = vmatpush1.msra.mxu0 0.0
  %861 = vmatprep.subr.mxu0 0.0
  %862 = vmatpush1.msra.mxu0 0.0
  %863 = vmatprep.subr.mxu0 0.0
  %864 = vmatpush1.msra.mxu0 0.0
  %865 = vmatprep.subr.mxu0 0.0
  %866 = vmatpush1.msra.mxu0 0.0
  %867 = vmatprep.subr.mxu0 0.0
  %868 = vmatpush1.msra.mxu0 0.0
  %869 = vmatprep.subr.mxu0 0.0
  %870 = vmatpush1.msra.mxu0 0.0
  %871 = vmatprep.subr.mxu0 0.0
  %872 = vmatpush1.msra.mxu0 0.0
  %873 = vmatprep.subr.mxu0 0.0
  %874 = vmatpush1.msra.mxu0 0.0
  %875 = vmatprep.subr.mxu0 0.0
  %876 = vmatpush1.msra.mxu0 0.0
  %877 = vmatprep.subr.mxu0 0.0
  %878 = vmatpush1.msra.mxu0 0.0
  %879 = vmatprep.subr.mxu0 0.0
  %880 = vmatpush1.msra.mxu0 0.0
  %881 = vmatprep.subr.mxu0 0.0
  %882 = vmatpush1.msra.mxu0 0.0
  %883 = vmatprep.subr.mxu0 0.0
  %884 = vmatpush1.msra.mxu0 0.0
  %885 = vmatprep.subr.mxu0 0.0
  %886 = vmatpush1.msra.mxu0 0.0
  %887 = vmatprep.subr.mxu0 0.0
  %888 = vmatpush1.msra.mxu0 0.0
  %889 = vmatprep.subr.mxu0 0.0
  %890 = vmatpush1.msra.mxu0 0.0
  %891 = vmatprep.subr.mxu0 0.0
  %892 = vmatpush1.msra.mxu0 0.0
  %893 = vmatprep.subr.mxu0 0.0
  %894 = vmatpush1.msra.mxu0 0.0
  %895 = vmatprep.subr.mxu0 0.0
  %896 = vmatpush1.msra.mxu0 0.0
  %897 = vmatprep.subr.mxu0 0.0
  %898 = vmatpush1.msra.mxu0 0.0
  %899 = vmatprep.subr.mxu0 0.0
  %900 = vmatpush1.msra.mxu0 0.0
  %901 = vmatprep.subr.mxu0 0.0
  %902 = vmatpush1.msra.mxu0 0.0
  %903 = vmatprep.mubr.f32.mxu0 0.0
  %904 = vmatmul.mubr.f32.gmra.mrb[0].mxu0 %v837
  %v905 = vpop.f32.mrb[0].mxu0
  %v906 = vadd.f32 %v199, %v905
  %v907 = vpop.f32.mrb[0].mxu0
  %908 = vdwg.mxu0
  %v909 = vxor.u32 %v906, 2147483648
  %v910 = vmul.f32 %v909, 1.442695
  %v911 = vpow.pop %v910
  %v912 = vadd.f32 %v911, 1.0
  %v913 = vrcp.pop %v912
  %v914 = vmul.f32 1.0, %v913
  %v915 = vtanh.pop %v906
  %v916 = vmul.f32 %v914, %v723
  %918 = vrot.lane.b32.xlu0 %v915, 64
  %v919 = vpop.permute.xlu0 %918
  %v921 = vmul.f32 %v914, %v919
  %923 = vrot.lane.b32.xlu0 %v921, 32
  %v924 = vpop.permute.xlu0 %923
  %v926 = vadd.f32 %v916, %v924
  %v927 = vtanh.pop %v926
  %929 = vrot.lane.b32.xlu0 %v927, 64
  %v930 = vpop.permute.xlu0 %929
  %v932 = vmul.f32 %v914, %v930
  %v933 = vsel %vm228, %v829, 0
  %935 = vmatprep.subr.mxu0 0.0
  %936 = vmatpush1.msra.mxu0 %v182
  %937 = vmatprep.subr.mxu0 0.0
  %938 = vmatpush1.msra.mxu0 %v183
  %939 = vmatprep.subr.mxu0 0.0
  %940 = vmatpush1.msra.mxu0 %v184
  %941 = vmatprep.subr.mxu0 0.0
  %942 = vmatpush1.msra.mxu0 %v185
  %943 = vmatprep.subr.mxu0 0.0
  %944 = vmatpush1.msra.mxu0 0.0
  %945 = vmatprep.subr.mxu0 0.0
  %946 = vmatpush1.msra.mxu0 0.0
  %947 = vmatprep.subr.mxu0 0.0
  %948 = vmatpush1.msra.mxu0 0.0
  %949 = vmatprep.subr.mxu0 0.0
  %950 = vmatpush1.msra.mxu0 0.0
  %951 = vmatprep.subr.mxu0 0.0
  %952 = vmatpush1.msra.mxu0 0.0
  %953 = vmatprep.subr.mxu0 0.0
  %954 = vmatpush1.msra.mxu0 0.0
  %955 = vmatprep.subr.mxu0 0.0
  %956 = vmatpush1.msra.mxu0 0.0
  %957 = vmatprep.subr.mxu0 0.0
  %958 = vmatpush1.msra.mxu0 0.0
  %959 = vmatprep.subr.mxu0 0.0
  %960 = vmatpush1.msra.mxu0 0.0
  %961 = vmatprep.subr.mxu0 0.0
  %962 = vmatpush1.msra.mxu0 0.0
  %963 = vmatprep.subr.mxu0 0.0
  %964 = vmatpush1.msra.mxu0 0.0
  %965 = vmatprep.subr.mxu0 0.0
  %966 = vmatpush1.msra.mxu0 0.0
  %967 = vmatprep.subr.mxu0 0.0
  %968 = vmatpush1.msra.mxu0 0.0
  %969 = vmatprep.subr.mxu0 0.0
  %970 = vmatpush1.msra.mxu0 0.0
  %971 = vmatprep.subr.mxu0 0.0
  %972 = vmatpush1.msra.mxu0 0.0
  %973 = vmatprep.subr.mxu0 0.0
  %974 = vmatpush1.msra.mxu0 0.0
  %975 = vmatprep.subr.mxu0 0.0
  %976 = vmatpush1.msra.mxu0 0.0
  %977 = vmatprep.subr.mxu0 0.0
  %978 = vmatpush1.msra.mxu0 0.0
  %979 = vmatprep.subr.mxu0 0.0
  %980 = vmatpush1.msra.mxu0 0.0
  %981 = vmatprep.subr.mxu0 0.0
  %982 = vmatpush1.msra.mxu0 0.0
  %983 = vmatprep.subr.mxu0 0.0
  %984 = vmatpush1.msra.mxu0 0.0
  %985 = vmatprep.subr.mxu0 0.0
  %986 = vmatpush1.msra.mxu0 0.0
  %987 = vmatprep.subr.mxu0 0.0
  %988 = vmatpush1.msra.mxu0 0.0
  %989 = vmatprep.subr.mxu0 0.0
  %990 = vmatpush1.msra.mxu0 0.0
  %991 = vmatprep.subr.mxu0 0.0
  %992 = vmatpush1.msra.mxu0 0.0
  %993 = vmatprep.subr.mxu0 0.0
  %994 = vmatpush1.msra.mxu0 0.0
  %995 = vmatprep.subr.mxu0 0.0
  %996 = vmatpush1.msra.mxu0 0.0
  %997 = vmatprep.subr.mxu0 0.0
  %998 = vmatpush1.msra.mxu0 0.0
  %999 = vmatprep.mubr.f32.mxu0 0.0
  %1000 = vmatmul.mubr.f32.gmra.mrb[0].mxu0 %v933
  %v1001 = vpop.f32.mrb[0].mxu0
  %v1002 = vadd.f32 0.0, %v1001
  %v1003 = vpop.f32.mrb[0].mxu0
  %1004 = vdwg.mxu0
  %v1005 = vadd.f32 %v164, %v1002
  %v1006 = vxor.u32 %v1005, 2147483648
  %v1007 = vmul.f32 %v1006, 1.442695
  %v1008 = vpow.pop %v1007
  %v1009 = vadd.f32 %v1008, 1.0
  %v1010 = vrcp.pop %v1009
  %v1011 = vmul.f32 1.0, %v1010
  %v1012 = vtanh.pop %v1005
  %v1013 = vmul.f32 %v1011, %v820
  %1015 = vrot.lane.b32.xlu0 %v1012, 64
  %v1016 = vpop.permute.xlu0 %1015
  %v1018 = vmul.f32 %v1011, %v1016
  %1020 = vrot.lane.b32.xlu0 %v1018, 32
  %v1021 = vpop.permute.xlu0 %1020
  %v1023 = vadd.f32 %v1013, %v1021
  %v1024 = vtanh.pop %v1023
  %1026 = vrot.lane.b32.xlu0 %v1024, 64
  %v1027 = vpop.permute.xlu0 %1026
  %v1029 = vmul.f32 %v1011, %v1027
  %1031 = vrot.lane.b32.xlu0 %v1029, 32
  %v1032 = vpop.permute.xlu0 %1031
  %1035 = vrot.lane.b32.xlu0 %v932, 64
  %v1036 = vpop.permute.xlu0 %1035
  %v1038 = vsel %vm228, %v1032, %v1036
  %v1040 = vsel %vm429, %v1038, 0
  %1042 = vmatprep.subr.mxu0 0.0
  %1043 = vmatpush1.msra.mxu0 %v186
  %1044 = vmatprep.subr.mxu0 0.0
  %1045 = vmatpush1.msra.mxu0 %v187
  %1046 = vmatprep.subr.mxu0 0.0
  %1047 = vmatpush1.msra.mxu0 %v188
  %1048 = vmatprep.subr.mxu0 0.0
  %1049 = vmatpush1.msra.mxu0 %v189
  %1050 = vmatprep.subr.mxu0 0.0
  %1051 = vmatpush1.msra.mxu0 %v190
  %1052 = vmatprep.subr.mxu0 0.0
  %1053 = vmatpush1.msra.mxu0 %v191
  %1054 = vmatprep.subr.mxu0 0.0
  %1055 = vmatpush1.msra.mxu0 %v192
  %1056 = vmatprep.subr.mxu0 0.0
  %1057 = vmatpush1.msra.mxu0 %v193
  %1058 = vmatprep.subr.mxu0 0.0
  %1059 = vmatpush1.msra.mxu0 0.0
  %1060 = vmatprep.subr.mxu0 0.0
  %1061 = vmatpush1.msra.mxu0 0.0
  %1062 = vmatprep.subr.mxu0 0.0
  %1063 = vmatpush1.msra.mxu0 0.0
  %1064 = vmatprep.subr.mxu0 0.0
  %1065 = vmatpush1.msra.mxu0 0.0
  %1066 = vmatprep.subr.mxu0 0.0
  %1067 = vmatpush1.msra.mxu0 0.0
  %1068 = vmatprep.subr.mxu0 0.0
  %1069 = vmatpush1.msra.mxu0 0.0
  %1070 = vmatprep.subr.mxu0 0.0
  %1071 = vmatpush1.msra.mxu0 0.0
  %1072 = vmatprep.subr.mxu0 0.0
  %1073 = vmatpush1.msra.mxu0 0.0
  %1074 = vmatprep.subr.mxu0 0.0
  %1075 = vmatpush1.msra.mxu0 0.0
  %1076 = vmatprep.subr.mxu0 0.0
  %1077 = vmatpush1.msra.mxu0 0.0
  %1078 = vmatprep.subr.mxu0 0.0
  %1079 = vmatpush1.msra.mxu0 0.0
  %1080 = vmatprep.subr.mxu0 0.0
  %1081 = vmatpush1.msra.mxu0 0.0
  %1082 = vmatprep.subr.mxu0 0.0
  %1083 = vmatpush1.msra.mxu0 0.0
  %1084 = vmatprep.subr.mxu0 0.0
  %1085 = vmatpush1.msra.mxu0 0.0
  %1086 = vmatprep.subr.mxu0 0.0
  %1087 = vmatpush1.msra.mxu0 0.0
  %1088 = vmatprep.subr.mxu0 0.0
  %1089 = vmatpush1.msra.mxu0 0.0
  %1090 = vmatprep.subr.mxu0 0.0
  %1091 = vmatpush1.msra.mxu0 0.0
  %1092 = vmatprep.subr.mxu0 0.0
  %1093 = vmatpush1.msra.mxu0 0.0
  %1094 = vmatprep.subr.mxu0 0.0
  %1095 = vmatpush1.msra.mxu0 0.0
  %1096 = vmatprep.subr.mxu0 0.0
  %1097 = vmatpush1.msra.mxu0 0.0
  %1098 = vmatprep.subr.mxu0 0.0
  %1099 = vmatpush1.msra.mxu0 0.0
  %1100 = vmatprep.subr.mxu0 0.0
  %1101 = vmatpush1.msra.mxu0 0.0
  %1102 = vmatprep.subr.mxu0 0.0
  %1103 = vmatpush1.msra.mxu0 0.0
  %1104 = vmatprep.subr.mxu0 0.0
  %1105 = vmatpush1.msra.mxu0 0.0
  %1106 = vmatprep.mubr.f32.mxu0 0.0
  %1107 = vmatmul.mubr.f32.gmra.mrb[0].mxu0 %v1040
  %v1108 = vpop.f32.mrb[0].mxu0
  %v1109 = vadd.f32 %v199, %v1108
  %v1110 = vpop.f32.mrb[0].mxu0
  %1111 = vdwg.mxu0
  %v1112 = vxor.u32 %v1109, 2147483648
  %v1113 = vmul.f32 %v1112, 1.442695
  %v1114 = vpow.pop %v1113
  %v1115 = vadd.f32 %v1114, 1.0
  %v1116 = vrcp.pop %v1115
  %v1117 = vmul.f32 1.0, %v1116
  %v1118 = vtanh.pop %v1109
  %v1119 = vmul.f32 %v1117, %v926
  %1121 = vrot.lane.b32.xlu0 %v1118, 64
  %v1122 = vpop.permute.xlu0 %1121
  %v1124 = vmul.f32 %v1117, %v1122
  %1126 = vrot.lane.b32.xlu0 %v1124, 32
  %v1127 = vpop.permute.xlu0 %1126
  %v1129 = vadd.f32 %v1119, %v1127
  %v1130 = vtanh.pop %v1129
  %1132 = vrot.lane.b32.xlu0 %v1130, 64
  %v1133 = vpop.permute.xlu0 %1132
  %v1135 = vmul.f32 %v1117, %v1133
  %v1136 = vsel %vm228, %v1032, 0
  %1138 = vmatprep.subr.mxu0 0.0
  %1139 = vmatpush1.msra.mxu0 %v182
  %1140 = vmatprep.subr.mxu0 0.0
  %1141 = vmatpush1.msra.mxu0 %v183
  %1142 = vmatprep.subr.mxu0 0.0
  %1143 = vmatpush1.msra.mxu0 %v184
  %1144 = vmatprep.subr.mxu0 0.0
  %1145 = vmatpush1.msra.mxu0 %v185
  %1146 = vmatprep.subr.mxu0 0.0
  %1147 = vmatpush1.msra.mxu0 0.0
  %1148 = vmatprep.subr.mxu0 0.0
  %1149 = vmatpush1.msra.mxu0 0.0
  %1150 = vmatprep.subr.mxu0 0.0
  %1151 = vmatpush1.msra.mxu0 0.0
  %1152 = vmatprep.subr.mxu0 0.0
  %1153 = vmatpush1.msra.mxu0 0.0
  %1154 = vmatprep.subr.mxu0 0.0
  %1155 = vmatpush1.msra.mxu0 0.0
  %1156 = vmatprep.subr.mxu0 0.0
  %1157 = vmatpush1.msra.mxu0 0.0
  %1158 = vmatprep.subr.mxu0 0.0
  %1159 = vmatpush1.msra.mxu0 0.0
  %1160 = vmatprep.subr.mxu0 0.0
  %1161 = vmatpush1.msra.mxu0 0.0
  %1162 = vmatprep.subr.mxu0 0.0
  %1163 = vmatpush1.msra.mxu0 0.0
  %1164 = vmatprep.subr.mxu0 0.0
  %1165 = vmatpush1.msra.mxu0 0.0
  %1166 = vmatprep.subr.mxu0 0.0
  %1167 = vmatpush1.msra.mxu0 0.0
  %1168 = vmatprep.subr.mxu0 0.0
  %1169 = vmatpush1.msra.mxu0 0.0
  %1170 = vmatprep.subr.mxu0 0.0
  %1171 = vmatpush1.msra.mxu0 0.0
  %1172 = vmatprep.subr.mxu0 0.0
  %1173 = vmatpush1.msra.mxu0 0.0
  %1174 = vmatprep.subr.mxu0 0.0
  %1175 = vmatpush1.msra.mxu0 0.0
  %1176 = vmatprep.subr.mxu0 0.0
  %1177 = vmatpush1.msra.mxu0 0.0
  %1178 = vmatprep.subr.mxu0 0.0
  %1179 = vmatpush1.msra.mxu0 0.0
  %1180 = vmatprep.subr.mxu0 0.0
  %1181 = vmatpush1.msra.mxu0 0.0
  %1182 = vmatprep.subr.mxu0 0.0
  %1183 = vmatpush1.msra.mxu0 0.0
  %1184 = vmatprep.subr.mxu0 0.0
  %1185 = vmatpush1.msra.mxu0 0.0
  %1186 = vmatprep.subr.mxu0 0.0
  %1187 = vmatpush1.msra.mxu0 0.0
  %1188 = vmatprep.subr.mxu0 0.0
  %1189 = vmatpush1.msra.mxu0 0.0
  %1190 = vmatprep.subr.mxu0 0.0
  %1191 = vmatpush1.msra.mxu0 0.0
  %1192 = vmatprep.subr.mxu0 0.0
  %1193 = vmatpush1.msra.mxu0 0.0
  %1194 = vmatprep.subr.mxu0 0.0
  %1195 = vmatpush1.msra.mxu0 0.0
  %1196 = vmatprep.subr.mxu0 0.0
  %1197 = vmatpush1.msra.mxu0 0.0
  %1198 = vmatprep.subr.mxu0 0.0
  %1199 = vmatpush1.msra.mxu0 0.0
  %1200 = vmatprep.subr.mxu0 0.0
  %1201 = vmatpush1.msra.mxu0 0.0
  %1202 = vmatprep.mubr.f32.mxu0 0.0
  %1203 = vmatmul.mubr.f32.gmra.mrb[0].mxu0 %v1136
  %v1204 = vpop.f32.mrb[0].mxu0
  %v1205 = vadd.f32 0.0, %v1204
  %v1206 = vpop.f32.mrb[0].mxu0
  %1207 = vdwg.mxu0
  %v1208 = vadd.f32 %v169, %v1205
  %v1209 = vxor.u32 %v1208, 2147483648
  %v1210 = vmul.f32 %v1209, 1.442695
  %v1211 = vpow.pop %v1210
  %v1212 = vadd.f32 %v1211, 1.0
  %v1213 = vrcp.pop %v1212
  %v1214 = vmul.f32 1.0, %v1213
  %v1215 = vtanh.pop %v1208
  %v1216 = vmul.f32 %v1214, %v1023
  %1218 = vrot.lane.b32.xlu0 %v1215, 64
  %v1219 = vpop.permute.xlu0 %1218
  %v1221 = vmul.f32 %v1214, %v1219
  %1223 = vrot.lane.b32.xlu0 %v1221, 32
  %v1224 = vpop.permute.xlu0 %1223
  %v1226 = vadd.f32 %v1216, %v1224
  %v1227 = vtanh.pop %v1226
  %1229 = vrot.lane.b32.xlu0 %v1227, 64
  %v1230 = vpop.permute.xlu0 %1229
  %v1232 = vmul.f32 %v1214, %v1230
  %1234 = vrot.lane.b32.xlu0 %v1232, 32
  %v1235 = vpop.permute.xlu0 %1234
  %1238 = vrot.lane.b32.xlu0 %v1135, 64
  %v1239 = vpop.permute.xlu0 %1238
  %v1241 = vsel %vm228, %v1235, %v1239
  %v1243 = vsel %vm429, %v1241, 0
  %1245 = vmatprep.subr.mxu0 0.0
  %1246 = vmatpush1.msra.mxu0 %v186
  %1247 = vmatprep.subr.mxu0 0.0
  %1248 = vmatpush1.msra.mxu0 %v187
  %1249 = vmatprep.subr.mxu0 0.0
  %1250 = vmatpush1.msra.mxu0 %v188
  %1251 = vmatprep.subr.mxu0 0.0
  %1252 = vmatpush1.msra.mxu0 %v189
  %1253 = vmatprep.subr.mxu0 0.0
  %1254 = vmatpush1.msra.mxu0 %v190
  %1255 = vmatprep.subr.mxu0 0.0
  %1256 = vmatpush1.msra.mxu0 %v191
  %1257 = vmatprep.subr.mxu0 0.0
  %1258 = vmatpush1.msra.mxu0 %v192
  %1259 = vmatprep.subr.mxu0 0.0
  %1260 = vmatpush1.msra.mxu0 %v193
  %1261 = vmatprep.subr.mxu0 0.0
  %1262 = vmatpush1.msra.mxu0 0.0
  %1263 = vmatprep.subr.mxu0 0.0
  %1264 = vmatpush1.msra.mxu0 0.0
  %1265 = vmatprep.subr.mxu0 0.0
  %1266 = vmatpush1.msra.mxu0 0.0
  %1267 = vmatprep.subr.mxu0 0.0
  %1268 = vmatpush1.msra.mxu0 0.0
  %1269 = vmatprep.subr.mxu0 0.0
  %1270 = vmatpush1.msra.mxu0 0.0
  %1271 = vmatprep.subr.mxu0 0.0
  %1272 = vmatpush1.msra.mxu0 0.0
  %1273 = vmatprep.subr.mxu0 0.0
  %1274 = vmatpush1.msra.mxu0 0.0
  %1275 = vmatprep.subr.mxu0 0.0
  %1276 = vmatpush1.msra.mxu0 0.0
  %1277 = vmatprep.subr.mxu0 0.0
  %1278 = vmatpush1.msra.mxu0 0.0
  %1279 = vmatprep.subr.mxu0 0.0
  %1280 = vmatpush1.msra.mxu0 0.0
  %1281 = vmatprep.subr.mxu0 0.0
  %1282 = vmatpush1.msra.mxu0 0.0
  %1283 = vmatprep.subr.mxu0 0.0
  %1284 = vmatpush1.msra.mxu0 0.0
  %1285 = vmatprep.subr.mxu0 0.0
  %1286 = vmatpush1.msra.mxu0 0.0
  %1287 = vmatprep.subr.mxu0 0.0
  %1288 = vmatpush1.msra.mxu0 0.0
  %1289 = vmatprep.subr.mxu0 0.0
  %1290 = vmatpush1.msra.mxu0 0.0
  %1291 = vmatprep.subr.mxu0 0.0
  %1292 = vmatpush1.msra.mxu0 0.0
  %1293 = vmatprep.subr.mxu0 0.0
  %1294 = vmatpush1.msra.mxu0 0.0
  %1295 = vmatprep.subr.mxu0 0.0
  %1296 = vmatpush1.msra.mxu0 0.0
  %1297 = vmatprep.subr.mxu0 0.0
  %1298 = vmatpush1.msra.mxu0 0.0
  %1299 = vmatprep.subr.mxu0 0.0
  %1300 = vmatpush1.msra.mxu0 0.0
  %1301 = vmatprep.subr.mxu0 0.0
  %1302 = vmatpush1.msra.mxu0 0.0
  %1303 = vmatprep.subr.mxu0 0.0
  %1304 = vmatpush1.msra.mxu0 0.0
  %1305 = vmatprep.subr.mxu0 0.0
  %1306 = vmatpush1.msra.mxu0 0.0
  %1307 = vmatprep.subr.mxu0 0.0
  %1308 = vmatpush1.msra.mxu0 0.0
  %1309 = vmatprep.mubr.f32.mxu0 0.0
  %1310 = vmatmul.mubr.f32.gmra.mrb[0].mxu0 %v1243
  %v1311 = vpop.f32.mrb[0].mxu0
  %v1312 = vadd.f32 %v199, %v1311
  %v1313 = vpop.f32.mrb[0].mxu0
  %1314 = vdwg.mxu0
  %v1315 = vxor.u32 %v1312, 2147483648
  %v1316 = vmul.f32 %v1315, 1.442695
  %v1317 = vpow.pop %v1316
  %v1318 = vadd.f32 %v1317, 1.0
  %v1319 = vrcp.pop %v1318
  %v1320 = vmul.f32 1.0, %v1319
  %v1321 = vtanh.pop %v1312
  %v1322 = vmul.f32 %v1320, %v1129
  %1324 = vrot.lane.b32.xlu0 %v1321, 64
  %v1325 = vpop.permute.xlu0 %1324
  %v1327 = vmul.f32 %v1320, %v1325
  %1329 = vrot.lane.b32.xlu0 %v1327, 32
  %v1330 = vpop.permute.xlu0 %1329
  %v1332 = vadd.f32 %v1322, %v1330
  %v1333 = vtanh.pop %v1332
  %1335 = vrot.lane.b32.xlu0 %v1333, 64
  %v1336 = vpop.permute.xlu0 %1335
  %v1338 = vmul.f32 %v1320, %v1336
  %v1339 = vsel %vm228, %v1235, 0
  %1341 = vmatprep.subr.mxu0 0.0
  %1342 = vmatpush1.msra.mxu0 %v182
  %1343 = vmatprep.subr.mxu0 0.0
  %1344 = vmatpush1.msra.mxu0 %v183
  %1345 = vmatprep.subr.mxu0 0.0
  %1346 = vmatpush1.msra.mxu0 %v184
  %1347 = vmatprep.subr.mxu0 0.0
  %1348 = vmatpush1.msra.mxu0 %v185
  %1349 = vmatprep.subr.mxu0 0.0
  %1350 = vmatpush1.msra.mxu0 0.0
  %1351 = vmatprep.subr.mxu0 0.0
  %1352 = vmatpush1.msra.mxu0 0.0
  %1353 = vmatprep.subr.mxu0 0.0
  %1354 = vmatpush1.msra.mxu0 0.0
  %1355 = vmatprep.subr.mxu0 0.0
  %1356 = vmatpush1.msra.mxu0 0.0
  %1357 = vmatprep.subr.mxu0 0.0
  %1358 = vmatpush1.msra.mxu0 0.0
  %1359 = vmatprep.subr.mxu0 0.0
  %1360 = vmatpush1.msra.mxu0 0.0
  %1361 = vmatprep.subr.mxu0 0.0
  %1362 = vmatpush1.msra.mxu0 0.0
  %1363 = vmatprep.subr.mxu0 0.0
  %1364 = vmatpush1.msra.mxu0 0.0
  %1365 = vmatprep.subr.mxu0 0.0
  %1366 = vmatpush1.msra.mxu0 0.0
  %1367 = vmatprep.subr.mxu0 0.0
  %1368 = vmatpush1.msra.mxu0 0.0
  %1369 = vmatprep.subr.mxu0 0.0
  %1370 = vmatpush1.msra.mxu0 0.0
  %1371 = vmatprep.subr.mxu0 0.0
  %1372 = vmatpush1.msra.mxu0 0.0
  %1373 = vmatprep.subr.mxu0 0.0
  %1374 = vmatpush1.msra.mxu0 0.0
  %1375 = vmatprep.subr.mxu0 0.0
  %1376 = vmatpush1.msra.mxu0 0.0
  %1377 = vmatprep.subr.mxu0 0.0
  %1378 = vmatpush1.msra.mxu0 0.0
  %1379 = vmatprep.subr.mxu0 0.0
  %1380 = vmatpush1.msra.mxu0 0.0
  %1381 = vmatprep.subr.mxu0 0.0
  %1382 = vmatpush1.msra.mxu0 0.0
  %1383 = vmatprep.subr.mxu0 0.0
  %1384 = vmatpush1.msra.mxu0 0.0
  %1385 = vmatprep.subr.mxu0 0.0
  %1386 = vmatpush1.msra.mxu0 0.0
  %1387 = vmatprep.subr.mxu0 0.0
  %1388 = vmatpush1.msra.mxu0 0.0
  %1389 = vmatprep.subr.mxu0 0.0
  %1390 = vmatpush1.msra.mxu0 0.0
  %1391 = vmatprep.subr.mxu0 0.0
  %1392 = vmatpush1.msra.mxu0 0.0
  %1393 = vmatprep.subr.mxu0 0.0
  %1394 = vmatpush1.msra.mxu0 0.0
  %1395 = vmatprep.subr.mxu0 0.0
  %1396 = vmatpush1.msra.mxu0 0.0
  %1397 = vmatprep.subr.mxu0 0.0
  %1398 = vmatpush1.msra.mxu0 0.0
  %1399 = vmatprep.subr.mxu0 0.0
  %1400 = vmatpush1.msra.mxu0 0.0
  %1401 = vmatprep.subr.mxu0 0.0
  %1402 = vmatpush1.msra.mxu0 0.0
  %1403 = vmatprep.subr.mxu0 0.0
  %1404 = vmatpush1.msra.mxu0 0.0
  %1405 = vmatprep.mubr.f32.mxu0 0.0
  %1406 = vmatmul.mubr.f32.gmra.mrb[0].mxu0 %v1339
  %v1407 = vpop.f32.mrb[0].mxu0
  %v1408 = vadd.f32 0.0, %v1407
  %v1409 = vpop.f32.mrb[0].mxu0
  %1410 = vdwg.mxu0
  %v1411 = vadd.f32 %v174, %v1408
  %v1412 = vxor.u32 %v1411, 2147483648
  %v1413 = vmul.f32 %v1412, 1.442695
  %v1414 = vpow.pop %v1413
  %v1415 = vadd.f32 %v1414, 1.0
  %v1416 = vrcp.pop %v1415
  %v1417 = vmul.f32 1.0, %v1416
  %v1418 = vtanh.pop %v1411
  %v1419 = vmul.f32 %v1417, %v1226
  %1421 = vrot.lane.b32.xlu0 %v1418, 64
  %v1422 = vpop.permute.xlu0 %1421
  %v1424 = vmul.f32 %v1417, %v1422
  %1426 = vrot.lane.b32.xlu0 %v1424, 32
  %v1427 = vpop.permute.xlu0 %1426
  %v1429 = vadd.f32 %v1419, %v1427
  %v1430 = vtanh.pop %v1429
  %1432 = vrot.lane.b32.xlu0 %v1430, 64
  %v1433 = vpop.permute.xlu0 %1432
  %v1435 = vmul.f32 %v1417, %v1433
  %1437 = vrot.lane.b32.xlu0 %v1435, 32
  %v1438 = vpop.permute.xlu0 %1437
  %1441 = vrot.lane.b32.xlu0 %v1338, 64
  %v1442 = vpop.permute.xlu0 %1441
  %v1444 = vsel %vm228, %v1438, %v1442
  %v1446 = vsel %vm429, %v1444, 0
  %1448 = vmatprep.subr.mxu0 0.0
  %1449 = vmatpush1.msra.mxu0 %v186
  %1450 = vmatprep.subr.mxu0 0.0
  %1451 = vmatpush1.msra.mxu0 %v187
  %1452 = vmatprep.subr.mxu0 0.0
  %1453 = vmatpush1.msra.mxu0 %v188
  %1454 = vmatprep.subr.mxu0 0.0
  %1455 = vmatpush1.msra.mxu0 %v189
  %1456 = vmatprep.subr.mxu0 0.0
  %1457 = vmatpush1.msra.mxu0 %v190
  %1458 = vmatprep.subr.mxu0 0.0
  %1459 = vmatpush1.msra.mxu0 %v191
  %1460 = vmatprep.subr.mxu0 0.0
  %1461 = vmatpush1.msra.mxu0 %v192
  %1462 = vmatprep.subr.mxu0 0.0
  %1463 = vmatpush1.msra.mxu0 %v193
  %1464 = vmatprep.subr.mxu0 0.0
  %1465 = vmatpush1.msra.mxu0 0.0
  %1466 = vmatprep.subr.mxu0 0.0
  %1467 = vmatpush1.msra.mxu0 0.0
  %1468 = vmatprep.subr.mxu0 0.0
  %1469 = vmatpush1.msra.mxu0 0.0
  %1470 = vmatprep.subr.mxu0 0.0
  %1471 = vmatpush1.msra.mxu0 0.0
  %1472 = vmatprep.subr.mxu0 0.0
  %1473 = vmatpush1.msra.mxu0 0.0
  %1474 = vmatprep.subr.mxu0 0.0
  %1475 = vmatpush1.msra.mxu0 0.0
  %1476 = vmatprep.subr.mxu0 0.0
  %1477 = vmatpush1.msra.mxu0 0.0
  %1478 = vmatprep.subr.mxu0 0.0
  %1479 = vmatpush1.msra.mxu0 0.0
  %1480 = vmatprep.subr.mxu0 0.0
  %1481 = vmatpush1.msra.mxu0 0.0
  %1482 = vmatprep.subr.mxu0 0.0
  %1483 = vmatpush1.msra.mxu0 0.0
  %1484 = vmatprep.subr.mxu0 0.0
  %1485 = vmatpush1.msra.mxu0 0.0
  %1486 = vmatprep.subr.mxu0 0.0
  %1487 = vmatpush1.msra.mxu0 0.0
  %1488 = vmatprep.subr.mxu0 0.0
  %1489 = vmatpush1.msra.mxu0 0.0
  %1490 = vmatprep.subr.mxu0 0.0
  %1491 = vmatpush1.msra.mxu0 0.0
  %1492 = vmatprep.subr.mxu0 0.0
  %1493 = vmatpush1.msra.mxu0 0.0
  %1494 = vmatprep.subr.mxu0 0.0
  %1495 = vmatpush1.msra.mxu0 0.0
  %1496 = vmatprep.subr.mxu0 0.0
  %1497 = vmatpush1.msra.mxu0 0.0
  %1498 = vmatprep.subr.mxu0 0.0
  %1499 = vmatpush1.msra.mxu0 0.0
  %1500 = vmatprep.subr.mxu0 0.0
  %1501 = vmatpush1.msra.mxu0 0.0
  %1502 = vmatprep.subr.mxu0 0.0
  %1503 = vmatpush1.msra.mxu0 0.0
  %1504 = vmatprep.subr.mxu0 0.0
  %1505 = vmatpush1.msra.mxu0 0.0
  %1506 = vmatprep.subr.mxu0 0.0
  %1507 = vmatpush1.msra.mxu0 0.0
  %1508 = vmatprep.subr.mxu0 0.0
  %1509 = vmatpush1.msra.mxu0 0.0
  %1510 = vmatprep.subr.mxu0 0.0
  %1511 = vmatpush1.msra.mxu0 0.0
  %1512 = vmatprep.mubr.f32.mxu0 0.0
  %1513 = vmatmul.mubr.f32.gmra.mrb[0].mxu0 %v1446
  %v1514 = vpop.f32.mrb[0].mxu0
  %v1515 = vadd.f32 %v199, %v1514
  %v1516 = vpop.f32.mrb[0].mxu0
  %1517 = vdwg.mxu0
  %v1518 = vxor.u32 %v1515, 2147483648
  %v1519 = vmul.f32 %v1518, 1.442695
  %v1520 = vpow.pop %v1519
  %v1521 = vadd.f32 %v1520, 1.0
  %v1522 = vrcp.pop %v1521
  %v1523 = vmul.f32 1.0, %v1522
  %v1524 = vtanh.pop %v1515
  %v1525 = vmul.f32 %v1523, %v1332
  %1527 = vrot.lane.b32.xlu0 %v1524, 64
  %v1528 = vpop.permute.xlu0 %1527
  %v1530 = vmul.f32 %v1523, %v1528
  %1532 = vrot.lane.b32.xlu0 %v1530, 32
  %v1533 = vpop.permute.xlu0 %1532
  %v1535 = vadd.f32 %v1525, %v1533
  %v1536 = vtanh.pop %v1535
  %1538 = vrot.lane.b32.xlu0 %v1536, 64
  %v1539 = vpop.permute.xlu0 %1538
  %v1541 = vmul.f32 %v1523, %v1539
  %v1542 = vsel %vm228, %v1438, 0
  %1544 = vmatprep.subr.mxu0 0.0
  %1545 = vmatpush1.msra.mxu0 %v182
  %1546 = vmatprep.subr.mxu0 0.0
  %1547 = vmatpush1.msra.mxu0 %v183
  %1548 = vmatprep.subr.mxu0 0.0
  %1549 = vmatpush1.msra.mxu0 %v184
  %1550 = vmatprep.subr.mxu0 0.0
  %1551 = vmatpush1.msra.mxu0 %v185
  %1552 = vmatprep.subr.mxu0 0.0
  %1553 = vmatpush1.msra.mxu0 0.0
  %1554 = vmatprep.subr.mxu0 0.0
  %1555 = vmatpush1.msra.mxu0 0.0
  %1556 = vmatprep.subr.mxu0 0.0
  %1557 = vmatpush1.msra.mxu0 0.0
  %1558 = vmatprep.subr.mxu0 0.0
  %1559 = vmatpush1.msra.mxu0 0.0
  %1560 = vmatprep.subr.mxu0 0.0
  %1561 = vmatpush1.msra.mxu0 0.0
  %1562 = vmatprep.subr.mxu0 0.0
  %1563 = vmatpush1.msra.mxu0 0.0
  %1564 = vmatprep.subr.mxu0 0.0
  %1565 = vmatpush1.msra.mxu0 0.0
  %1566 = vmatprep.subr.mxu0 0.0
  %1567 = vmatpush1.msra.mxu0 0.0
  %1568 = vmatprep.subr.mxu0 0.0
  %1569 = vmatpush1.msra.mxu0 0.0
  %1570 = vmatprep.subr.mxu0 0.0
  %1571 = vmatpush1.msra.mxu0 0.0
  %1572 = vmatprep.subr.mxu0 0.0
  %1573 = vmatpush1.msra.mxu0 0.0
  %1574 = vmatprep.subr.mxu0 0.0
  %1575 = vmatpush1.msra.mxu0 0.0
  %1576 = vmatprep.subr.mxu0 0.0
  %1577 = vmatpush1.msra.mxu0 0.0
  %1578 = vmatprep.subr.mxu0 0.0
  %1579 = vmatpush1.msra.mxu0 0.0
  %1580 = vmatprep.subr.mxu0 0.0
  %1581 = vmatpush1.msra.mxu0 0.0
  %1582 = vmatprep.subr.mxu0 0.0
  %1583 = vmatpush1.msra.mxu0 0.0
  %1584 = vmatprep.subr.mxu0 0.0
  %1585 = vmatpush1.msra.mxu0 0.0
  %1586 = vmatprep.subr.mxu0 0.0
  %1587 = vmatpush1.msra.mxu0 0.0
  %1588 = vmatprep.subr.mxu0 0.0
  %1589 = vmatpush1.msra.mxu0 0.0
  %1590 = vmatprep.subr.mxu0 0.0
  %1591 = vmatpush1.msra.mxu0 0.0
  %1592 = vmatprep.subr.mxu0 0.0
  %1593 = vmatpush1.msra.mxu0 0.0
  %1594 = vmatprep.subr.mxu0 0.0
  %1595 = vmatpush1.msra.mxu0 0.0
  %1596 = vmatprep.subr.mxu0 0.0
  %1597 = vmatpush1.msra.mxu0 0.0
  %1598 = vmatprep.subr.mxu0 0.0
  %1599 = vmatpush1.msra.mxu0 0.0
  %1600 = vmatprep.subr.mxu0 0.0
  %1601 = vmatpush1.msra.mxu0 0.0
  %1602 = vmatprep.subr.mxu0 0.0
  %1603 = vmatpush1.msra.mxu0 0.0
  %1604 = vmatprep.subr.mxu0 0.0
  %1605 = vmatpush1.msra.mxu0 0.0
  %1606 = vmatprep.subr.mxu0 0.0
  %1607 = vmatpush1.msra.mxu0 0.0
  %1608 = vmatprep.mubr.f32.mxu0 0.0
  %1609 = vmatmul.mubr.f32.gmra.mrb[0].mxu0 %v1542
  %v1610 = vpop.f32.mrb[0].mxu0
  %v1611 = vadd.f32 0.0, %v1610
  %v1612 = vpop.f32.mrb[0].mxu0
  %1613 = vdwg.mxu0
  %v1614 = vadd.f32 %v179, %v1611
  %v1615 = vxor.u32 %v1614, 2147483648
  %v1616 = vmul.f32 %v1615, 1.442695
  %v1617 = vpow.pop %v1616
  %v1618 = vadd.f32 %v1617, 1.0
  %v1619 = vrcp.pop %v1618
  %v1620 = vmul.f32 1.0, %v1619
  %v1621 = vtanh.pop %v1614
  %v1622 = vmul.f32 %v1620, %v1429
  %1624 = vrot.lane.b32.xlu0 %v1621, 64
  %v1625 = vpop.permute.xlu0 %1624
  %v1627 = vmul.f32 %v1620, %v1625
  %1629 = vrot.lane.b32.xlu0 %v1627, 32
  %v1630 = vpop.permute.xlu0 %1629
  %v1632 = vadd.f32 %v1622, %v1630
  %v1633 = vtanh.pop %v1632
  %1635 = vrot.lane.b32.xlu0 %v1633, 64
  %v1636 = vpop.permute.xlu0 %1635
  %v1638 = vmul.f32 %v1620, %v1636
  %1640 = vrot.lane.b32.xlu0 %v1638, 32
  %v1641 = vpop.permute.xlu0 %1640
  %1644 = vrot.lane.b32.xlu0 %v1541, 64
  %v1645 = vpop.permute.xlu0 %1644
  %v1647 = vsel %vm228, %v1641, %v1645
  %v1649 = vsel %vm429, %v1647, 0
  %1651 = vmatprep.subr.mxu0 0.0
  %1652 = vmatpush1.msra.mxu0 %v186
  %1653 = vmatprep.subr.mxu0 0.0
  %1654 = vmatpush1.msra.mxu0 %v187
  %1655 = vmatprep.subr.mxu0 0.0
  %1656 = vmatpush1.msra.mxu0 %v188
  %1657 = vmatprep.subr.mxu0 0.0
  %1658 = vmatpush1.msra.mxu0 %v189
  %1659 = vmatprep.subr.mxu0 0.0
  %1660 = vmatpush1.msra.mxu0 %v190
  %1661 = vmatprep.subr.mxu0 0.0
  %1662 = vmatpush1.msra.mxu0 %v191
  %1663 = vmatprep.subr.mxu0 0.0
  %1664 = vmatpush1.msra.mxu0 %v192
  %1665 = vmatprep.subr.mxu0 0.0
  %1666 = vmatpush1.msra.mxu0 %v193
  %1667 = vmatprep.subr.mxu0 0.0
  %1668 = vmatpush1.msra.mxu0 0.0
  %1669 = vmatprep.subr.mxu0 0.0
  %1670 = vmatpush1.msra.mxu0 0.0
  %1671 = vmatprep.subr.mxu0 0.0
  %1672 = vmatpush1.msra.mxu0 0.0
  %1673 = vmatprep.subr.mxu0 0.0
  %1674 = vmatpush1.msra.mxu0 0.0
  %1675 = vmatprep.subr.mxu0 0.0
  %1676 = vmatpush1.msra.mxu0 0.0
  %1677 = vmatprep.subr.mxu0 0.0
  %1678 = vmatpush1.msra.mxu0 0.0
  %1679 = vmatprep.subr.mxu0 0.0
  %1680 = vmatpush1.msra.mxu0 0.0
  %1681 = vmatprep.subr.mxu0 0.0
  %1682 = vmatpush1.msra.mxu0 0.0
  %1683 = vmatprep.subr.mxu0 0.0
  %1684 = vmatpush1.msra.mxu0 0.0
  %1685 = vmatprep.subr.mxu0 0.0
  %1686 = vmatpush1.msra.mxu0 0.0
  %1687 = vmatprep.subr.mxu0 0.0
  %1688 = vmatpush1.msra.mxu0 0.0
  %1689 = vmatprep.subr.mxu0 0.0
  %1690 = vmatpush1.msra.mxu0 0.0
  %1691 = vmatprep.subr.mxu0 0.0
  %1692 = vmatpush1.msra.mxu0 0.0
  %1693 = vmatprep.subr.mxu0 0.0
  %1694 = vmatpush1.msra.mxu0 0.0
  %1695 = vmatprep.subr.mxu0 0.0
  %1696 = vmatpush1.msra.mxu0 0.0
  %1697 = vmatprep.subr.mxu0 0.0
  %1698 = vmatpush1.msra.mxu0 0.0
  %1699 = vmatprep.subr.mxu0 0.0
  %1700 = vmatpush1.msra.mxu0 0.0
  %1701 = vmatprep.subr.mxu0 0.0
  %1702 = vmatpush1.msra.mxu0 0.0
  %1703 = vmatprep.subr.mxu0 0.0
  %1704 = vmatpush1.msra.mxu0 0.0
  %1705 = vmatprep.subr.mxu0 0.0
  %1706 = vmatpush1.msra.mxu0 0.0
  %1707 = vmatprep.subr.mxu0 0.0
  %1708 = vmatpush1.msra.mxu0 0.0
  %1709 = vmatprep.subr.mxu0 0.0
  %1710 = vmatpush1.msra.mxu0 0.0
  %1711 = vmatprep.subr.mxu0 0.0
  %1712 = vmatpush1.msra.mxu0 0.0
  %1713 = vmatprep.subr.mxu0 0.0
  %1714 = vmatpush1.msra.mxu0 0.0
  %1715 = vmatprep.mubr.f32.mxu0 0.0
  %1716 = vmatmul.mubr.f32.gmra.mrb[0].mxu0 %v1649
  %v1717 = vpop.f32.mrb[0].mxu0
  %v1718 = vadd.f32 %v199, %v1717
  %v1719 = vpop.f32.mrb[0].mxu0
  %1720 = vdwg.mxu0
  %v1721 = vxor.u32 %v1718, 2147483648
  %v1722 = vmul.f32 %v1721, 1.442695
  %v1723 = vpow.pop %v1722
  %v1724 = vadd.f32 %v1723, 1.0
  %v1725 = vrcp.pop %v1724
  %v1726 = vmul.f32 1.0, %v1725
  %v1727 = vtanh.pop %v1718
  %v1728 = vmul.f32 %v1726, %v1535
  %1730 = vrot.lane.b32.xlu0 %v1727, 64
  %v1731 = vpop.permute.xlu0 %1730
  %v1733 = vmul.f32 %v1726, %v1731
  %1735 = vrot.lane.b32.xlu0 %v1733, 32
  %v1736 = vpop.permute.xlu0 %1735
  %v1738 = vadd.f32 %v1728, %v1736
  %v1739 = vtanh.pop %v1738
  %1741 = vrot.lane.b32.xlu0 %v1739, 64
  %v1742 = vpop.permute.xlu0 %1741
  %v1744 = vmul.f32 %v1726, %v1742
  %v1745 = vmax.f32 %v1744, 0.0
  %v1746 = vld [vmem:[%s6] sm:$0xff]
  %v1747 = vld [vmem:[%s6 + $0x8] sm:$0xff]
  %v1748 = vld [vmem:[%s6 + $0x10] sm:$0xff]
  %v1749 = vld [vmem:[%s6 + $0x18] sm:$0xff]
  %v1750 = vld [vmem:[%s7] sm:$0x1]
  %v1752 = vlaneseq
  %v1753 = vshrl.u32 %v1752, 7
  %v1754 = vsub.s32 0, %v1753
  %v1755 = vrot.slane %v1750, %v1754
  %1758 = vrot.lane.b32.xlu0 %v1745, 32
  %v1759 = vpop.permute.xlu0 %1758
  %v1760 = vsel %vm228, %v1759, 0
  %1762 = vmatprep.subr.mxu0 0.0
  %1763 = vmatpush1.msra.mxu0 %v1746
  %1764 = vmatprep.subr.mxu0 0.0
  %1765 = vmatpush1.msra.mxu0 %v1747
  %1766 = vmatprep.subr.mxu0 0.0
  %1767 = vmatpush1.msra.mxu0 %v1748
  %1768 = vmatprep.subr.mxu0 0.0
  %1769 = vmatpush1.msra.mxu0 %v1749
  %1770 = vmatprep.subr.mxu0 0.0
  %1771 = vmatpush1.msra.mxu0 0.0
  %1772 = vmatprep.subr.mxu0 0.0
  %1773 = vmatpush1.msra.mxu0 0.0
  %1774 = vmatprep.subr.mxu0 0.0
  %1775 = vmatpush1.msra.mxu0 0.0
  %1776 = vmatprep.subr.mxu0 0.0
  %1777 = vmatpush1.msra.mxu0 0.0
  %1778 = vmatprep.subr.mxu0 0.0
  %1779 = vmatpush1.msra.mxu0 0.0
  %1780 = vmatprep.subr.mxu0 0.0
  %1781 = vmatpush1.msra.mxu0 0.0
  %1782 = vmatprep.subr.mxu0 0.0
  %1783 = vmatpush1.msra.mxu0 0.0
  %1784 = vmatprep.subr.mxu0 0.0
  %1785 = vmatpush1.msra.mxu0 0.0
  %1786 = vmatprep.subr.mxu0 0.0
  %1787 = vmatpush1.msra.mxu0 0.0
  %1788 = vmatprep.subr.mxu0 0.0
  %1789 = vmatpush1.msra.mxu0 0.0
  %1790 = vmatprep.subr.mxu0 0.0
  %1791 = vmatpush1.msra.mxu0 0.0
  %1792 = vmatprep.subr.mxu0 0.0
  %1793 = vmatpush1.msra.mxu0 0.0
  %1794 = vmatprep.subr.mxu0 0.0
  %1795 = vmatpush1.msra.mxu0 0.0
  %1796 = vmatprep.subr.mxu0 0.0
  %1797 = vmatpush1.msra.mxu0 0.0
  %1798 = vmatprep.subr.mxu0 0.0
  %1799 = vmatpush1.msra.mxu0 0.0
  %1800 = vmatprep.subr.mxu0 0.0
  %1801 = vmatpush1.msra.mxu0 0.0
  %1802 = vmatprep.subr.mxu0 0.0
  %1803 = vmatpush1.msra.mxu0 0.0
  %1804 = vmatprep.subr.mxu0 0.0
  %1805 = vmatpush1.msra.mxu0 0.0
  %1806 = vmatprep.subr.mxu0 0.0
  %1807 = vmatpush1.msra.mxu0 0.0
  %1808 = vmatprep.subr.mxu0 0.0
  %1809 = vmatpush1.msra.mxu0 0.0
  %1810 = vmatprep.subr.mxu0 0.0
  %1811 = vmatpush1.msra.mxu0 0.0
  %1812 = vmatprep.subr.mxu0 0.0
  %1813 = vmatpush1.msra.mxu0 0.0
  %1814 = vmatprep.subr.mxu0 0.0
  %1815 = vmatpush1.msra.mxu0 0.0
  %1816 = vmatprep.subr.mxu0 0.0
  %1817 = vmatpush1.msra.mxu0 0.0
  %1818 = vmatprep.subr.mxu0 0.0
  %1819 = vmatpush1.msra.mxu0 0.0
  %1820 = vmatprep.subr.mxu0 0.0
  %1821 = vmatpush1.msra.mxu0 0.0
  %1822 = vmatprep.subr.mxu0 0.0
  %1823 = vmatpush1.msra.mxu0 0.0
  %1824 = vmatprep.subr.mxu0 0.0
  %1825 = vmatpush1.msra.mxu0 0.0
  %1826 = vmatprep.mubr.f32.mxu0 0.0
  %1827 = vmatmul.mubr.f32.gmra.mrb[0].mxu0 %v1760
  %v1828 = vpop.f32.mrb[0].mxu0
  %v1829 = vadd.f32 %v1755, %v1828
  %v1830 = vpop.f32.mrb[0].mxu0
  %1831 = vdwg.mxu0
  %v1832 = vmax.f32 %v1829, 0.0
  %v1833 = vld [vmem:[%s8] sm:$0xff]
  %v1834 = vld [vmem:[%s8 + $0x8] sm:$0xff]
  %v1835 = vld [vmem:[%s8 + $0x10] sm:$0xff]
  %v1836 = vld [vmem:[%s8 + $0x18] sm:$0xff]
  %v1837 = vld [vmem:[%s8 + $0x20] sm:$0xff]
  %v1838 = vld [vmem:[%s8 + $0x28] sm:$0xff]
  %v1839 = vld [vmem:[%s8 + $0x30] sm:$0xff]
  %v1840 = vld [vmem:[%s8 + $0x38] sm:$0xff]
  %v1841 = vld [vmem:[%s8 + $0x40] sm:$0xff]
  %v1842 = vld [vmem:[%s8 + $0x48] sm:$0xff]
  %v1843 = vld [vmem:[%s8 + $0x50] sm:$0xff]
  %v1844 = vld [vmem:[%s8 + $0x58] sm:$0xff]
  %v1845 = vld [vmem:[%s8 + $0x60] sm:$0xff]
  %v1846 = vld [vmem:[%s8 + $0x68] sm:$0xff]
  %v1847 = vld [vmem:[%s8 + $0x70] sm:$0xff]
  %v1848 = vld [vmem:[%s8 + $0x78] sm:$0xff]
  %v1849 = vld [vmem:[%s9] sm:$0x1]
  %v1851 = vlaneseq
  %v1852 = vshrl.u32 %v1851, 7
  %v1853 = vsub.s32 0, %v1852
  %v1854 = vrot.slane %v1849, %v1853
  %1856 = vmatprep.subr.mxu0 0.0
  %1857 = vmatpush1.msra.mxu0 %v1833
  %1858 = vmatprep.subr.mxu0 0.0
  %1859 = vmatpush1.msra.mxu0 %v1834
  %1860 = vmatprep.subr.mxu0 0.0
  %1861 = vmatpush1.msra.mxu0 %v1835
  %1862 = vmatprep.subr.mxu0 0.0
  %1863 = vmatpush1.msra.mxu0 %v1836
  %1864 = vmatprep.subr.mxu0 0.0
  %1865 = vmatpush1.msra.mxu0 %v1837
  %1866 = vmatprep.subr.mxu0 0.0
  %1867 = vmatpush1.msra.mxu0 %v1838
  %1868 = vmatprep.subr.mxu0 0.0
  %1869 = vmatpush1.msra.mxu0 %v1839
  %1870 = vmatprep.subr.mxu0 0.0
  %1871 = vmatpush1.msra.mxu0 %v1840
  %1872 = vmatprep.subr.mxu0 0.0
  %1873 = vmatpush1.msra.mxu0 %v1841
  %1874 = vmatprep.subr.mxu0 0.0
  %1875 = vmatpush1.msra.mxu0 %v1842
  %1876 = vmatprep.subr.mxu0 0.0
  %1877 = vmatpush1.msra.mxu0 %v1843
  %1878 = vmatprep.subr.mxu0 0.0
  %1879 = vmatpush1.msra.mxu0 %v1844
  %1880 = vmatprep.subr.mxu0 0.0
  %1881 = vmatpush1.msra.mxu0 %v1845
  %1882 = vmatprep.subr.mxu0 0.0
  %1883 = vmatpush1.msra.mxu0 %v1846
  %1884 = vmatprep.subr.mxu0 0.0
  %1885 = vmatpush1.msra.mxu0 %v1847
  %1886 = vmatprep.subr.mxu0 0.0
  %1887 = vmatpush1.msra.mxu0 %v1848
  %1888 = vmatprep.subr.mxu0 0.0
  %1889 = vmatpush1.msra.mxu0 0.0
  %1890 = vmatprep.subr.mxu0 0.0
  %1891 = vmatpush1.msra.mxu0 0.0
  %1892 = vmatprep.subr.mxu0 0.0
  %1893 = vmatpush1.msra.mxu0 0.0
  %1894 = vmatprep.subr.mxu0 0.0
  %1895 = vmatpush1.msra.mxu0 0.0
  %1896 = vmatprep.subr.mxu0 0.0
  %1897 = vmatpush1.msra.mxu0 0.0
  %1898 = vmatprep.subr.mxu0 0.0
  %1899 = vmatpush1.msra.mxu0 0.0
  %1900 = vmatprep.subr.mxu0 0.0
  %1901 = vmatpush1.msra.mxu0 0.0
  %1902 = vmatprep.subr.mxu0 0.0
  %1903 = vmatpush1.msra.mxu0 0.0
  %1904 = vmatprep.subr.mxu0 0.0
  %1905 = vmatpush1.msra.mxu0 0.0
  %1906 = vmatprep.subr.mxu0 0.0
  %1907 = vmatpush1.msra.mxu0 0.0
  %1908 = vmatprep.subr.mxu0 0.0
  %1909 = vmatpush1.msra.mxu0 0.0
  %1910 = vmatprep.subr.mxu0 0.0
  %1911 = vmatpush1.msra.mxu0 0.0
  %1912 = vmatprep.subr.mxu0 0.0
  %1913 = vmatpush1.msra.mxu0 0.0
  %1914 = vmatprep.subr.mxu0 0.0
  %1915 = vmatpush1.msra.mxu0 0.0
  %1916 = vmatprep.subr.mxu0 0.0
  %1917 = vmatpush1.msra.mxu0 0.0
  %1918 = vmatprep.subr.mxu0 0.0
  %1919 = vmatpush1.msra.mxu0 0.0
  %1920 = vmatprep.mubr.f32.mxu0 0.0
  %1921 = vmatmul.mubr.f32.gmra.mrb[0].mxu0 %v1832
  %v1922 = vpop.f32.mrb[0].mxu0
  %v1923 = vadd.f32 %v1854, %v1922
  %v1924 = vpop.f32.mrb[0].mxu0
  %1925 = vdwg.mxu0
  %vm1926 = vcmask 31744
  %v1927 = vsel %vm1926, %v1923, -inf
  %1928 = vmax.xlane.f32.xlu0 %v1927
  %v1929 = vpop.xlane.xlu0 %1928
  %v1930 = vsub.f32 %v1923, %v1929
  %v1931 = vmul.f32 %v1930, 1.442695
  %v1932 = vpow.pop %v1931
  %v1933 = vsel %vm1926, %v1932, 0.0
  %1934 = vadd.xlane.f32.xlu0 %v1933
  %v1935 = vpop.xlane.xlu0 %1934
  %v1936 = vrcp.pop %v1935
  %v1937 = vmul.f32 %v1932, %v1936
  %1938 = vst.msk [vmem:[%s10] sm:$0xff] %vm1926, %v1937
  // Predicated region
  $region42: #{lstm_forward.1} parent=0 // pred_check
    _
  $region43: #{lstm_forward.1} parent=0 // pred_check_branch
    %1940 = sbr.rel (0) target = $region45
  $region44: #{lstm_forward.1} parent=0 // pred_region
    _
  $region45: #{lstm_forward.1} parent=0 // pred_fallthru
    _
  // Predicated region
  $region46: #{lstm_forward.1} parent=0 // pred_check
    _
  $region47: #{lstm_forward.1} parent=0 // pred_check_branch
    %1942 = sbr.rel (0) target = $region49
  $region48: #{lstm_forward.1} parent=0 // pred_region
    _
  $region49: #{lstm_forward.1} parent=0 // pred_fallthru
    _

</llo_original>
